<compile_context>
chip_gen: v7x
topology: tpu7x:2x2x1
jax: 0.10.0
libtpu: 0.0.40
codegen_flags: <defaults>
</compile_context>

<pallas_src>
import numpy as np

import jax
import jax.numpy as jnp
from jax import lax
from jax.experimental import pallas as pl
from jax.experimental.pallas import tpu as pltpu


def _build_selection(H, W, KH, KW, pad):
    """S[t, q, p] = 1 iff input pixel q = ii*W+jj feeds output pixel p = i*W+j
    through conv tap t = kh*KW+kw. Out-of-image taps (zero padding) simply
    leave the column all-zero, so no explicit spatial padding is needed."""
    HW = H * W
    S = np.zeros((KH * KW, HW, HW), dtype=np.float32)
    for t in range(KH * KW):
        kh, kw = divmod(t, KW)
        for p in range(HW):
            i, j = divmod(p, W)
            ii = i + kh - pad
            jj = j + kw - pad
            if 0 <= ii < H and 0 <= jj < W:
                S[t, ii * W + jj, p] = 1.0
    return S


def make_conv_cat_kernel(H, W, Cin, Cout, Ca, Cb, KH=3, KW=3):
    HW = H * W
    taps = KH * KW

    def kernel(s_ref, w_ref, x_ref, a_ref, b_ref, out_ref, xcol_ref):
        # s_ref:   (taps, HW, HW)    constant 0/1 tap-selection matrices
        # w_ref:   (Cout, taps*Cin)  conv weight, columns ordered (kh, kw, ci)
        # x_ref:   (Cin, HW)         conv input, NCHW-flat
        # a_ref:   (Ca, HW)          x481, NCHW-flat pass-through
        # b_ref:   (Cb, HW)          x495, NCHW-flat pass-through
        # out_ref: (Ca+Cout+Cb, HW)  fused concat output, NCHW-flat
        # xcol_ref:(taps*Cin, HW)    f32 VMEM scratch: im2col matrix
        x = x_ref[...]
        # im2col via MXU gather matmuls (no strided slice/reshape copies):
        #   xcol[t*Cin + ci, p] = x[ci, gather_t(p)]  (0 where padding).
        for t in range(taps):
            xcol_ref[t * Cin:(t + 1) * Cin, :] = jnp.dot(
                x, s_ref[t], preferred_element_type=jnp.float32)
        # Single big-K conv matmul: (Cout, taps*Cin) x (taps*Cin, HW).
        y = jnp.dot(w_ref[...], xcol_ref[...],
                    preferred_element_type=jnp.float32)
        # Fused channel concat, written directly in NCHW-flat row ranges
        # (all row offsets are multiples of 8 -> sublane-aligned stores).
        out_ref[0:Ca, :] = a_ref[...]
        out_ref[Ca:Ca + Cout, :] = y.astype(out_ref.dtype)
        out_ref[Ca + Cout:Ca + Cout + Cb, :] = b_ref[...]

    return kernel


def conv2d_cat(x487, x481, x495, weight):
    """Equivalent of M.forward. Inputs are NCHW, weight is OIHW."""
    N, Cin, H, W = x487.shape
    assert N == 1, "kernel implemented for batch=1 (as in the reference module)"
    Cout, Cin_w, KH, KW = weight.shape
    assert Cin_w == Cin and KH == 3 and KW == 3
    Ca = x481.shape[1]
    Cb = x495.shape[1]
    HW = H * W
    Ctot = Ca + Cout + Cb
    taps = KH * KW

    # Glue: only free NCHW reshapes + a tiny weight transpose. No transposes
    # of the large pass-through tensors or of the output.
    x = x487[0].reshape(Cin, HW)                                  # (Cin, HW)
    a = x481[0].reshape(Ca, HW)                                   # (Ca,  HW)
    b = x495[0].reshape(Cb, HW)                                   # (Cb,  HW)
    w_flat = jnp.transpose(weight, (0, 2, 3, 1)).reshape(Cout, taps * Cin)
    sel = jnp.asarray(_build_selection(H, W, KH, KW, pad=1))      # constant

    kernel = make_conv_cat_kernel(H, W, Cin, Cout, Ca, Cb, KH, KW)

    flops = 2 * (taps * Cin * HW * HW + Cout * taps * Cin * HW)
    bytes_accessed = 4 * (sel.size + w_flat.size + x.size + a.size + b.size
                          + Ctot * HW)

    out_flat = pl.pallas_call(
        kernel,
        out_shape=jax.ShapeDtypeStruct((Ctot, HW), x487.dtype),
        in_specs=[pl.BlockSpec(memory_space=pltpu.MemorySpace.VMEM)
                  for _ in range(5)],
        out_specs=pl.BlockSpec(memory_space=pltpu.MemorySpace.VMEM),
        scratch_shapes=[pltpu.VMEM((taps * Cin, HW), jnp.float32)],
        cost_estimate=pl.CostEstimate(
            flops=flops, transcendentals=0, bytes_accessed=bytes_accessed),
    )(sel, w_flat, x, a, b)

    # Free reshape back to NCHW.
    return out_flat.reshape(1, Ctot, H, W)


def reference(x487, x481, x495, weight):
    conv = lax.conv_general_dilated(
        x487, weight, window_strides=(1, 1), padding=((1, 1), (1, 1)),
        dimension_numbers=("NCHW", "OIHW", "NCHW"))
    return jnp.concatenate([x481, conv, x495], axis=1)


if __name__ == "__main__":
    key = jax.random.PRNGKey(0)
    k1, k2, k3, k4 = jax.random.split(key, 4)

    # Shapes taken directly from the module (already small).
    x481 = jax.random.normal(k1, (1, 896, 7, 7), dtype=jnp.float32)
    x487 = jax.random.normal(k2, (1, 128, 7, 7), dtype=jnp.float32)
    x495 = jax.random.normal(k3, (1, 32, 7, 7), dtype=jnp.float32)
    # Conv2d(128, 32, 3x3, bias=False) weight in OIHW.
    weight = jax.random.normal(k4, (32, 128, 3, 3), dtype=jnp.float32) * 0.05

    out = jax.block_until_ready(conv2d_cat(x487, x481, x495, weight))
    ref = jax.block_until_ready(reference(x487, x481, x495, weight))

    assert out.shape == (1, 960, 7, 7), out.shape
    max_err = float(jnp.max(jnp.abs(out - ref)))
    assert jnp.allclose(out, ref, atol=1e-3, rtol=1e-3), max_err
    print("KERNEL_OK")
</pallas_src>

<mosaic_0001>
module attributes {stable_mosaic.version = 11 : i64} {
  func.func @kernel(%arg0: memref<9x49x49xf32, #tpu.memory_space<vmem>>, %arg1: memref<32x1152xf32, #tpu.memory_space<vmem>>, %arg2: memref<128x49xf32, #tpu.memory_space<vmem>>, %arg3: memref<896x49xf32, #tpu.memory_space<vmem>>, %arg4: memref<32x49xf32, #tpu.memory_space<vmem>>, %arg5: memref<960x49xf32, #tpu.memory_space<vmem>>, %arg6: memref<1152x49xf32, #tpu.memory_space<vmem>>) attributes {dimension_semantics = [], scalar_prefetch = 0 : i64, scratch_operands = 1 : i64, tpu.core_type = #tpu.core_type<tc>} {
    %c0 = arith.constant 0 : index
    %c0_0 = arith.constant 0 : index
    %0 = vector.load %arg2[%c0, %c0_0] : memref<128x49xf32, #tpu.memory_space<vmem>>, vector<128x49xf32>
    %c0_1 = arith.constant 0 : index
    %c0_2 = arith.constant 0 : index
    %c0_3 = arith.constant 0 : index
    %1 = vector.load %arg0[%c0_1, %c0_2, %c0_3] : memref<9x49x49xf32, #tpu.memory_space<vmem>>, vector<1x49x49xf32>
    %2 = vector.shape_cast %1 : vector<1x49x49xf32> to vector<49x49xf32>
    %cst = arith.constant dense<0.000000e+00> : vector<128x49xf32>
    %3 = tpu.matmul %0, %2, %cst {dimension_numbers = #tpu.dot_dimension_numbers<[1], [0], [0], [1], [0, 0, 1, 1], [], []>} : vector<128x49xf32>, vector<49x49xf32>, vector<128x49xf32> -> vector<128x49xf32>
    %c0_4 = arith.constant 0 : index
    %c0_5 = arith.constant 0 : index
    %4 = vector.load %arg6[%c0_4, %c0_5] : memref<1152x49xf32, #tpu.memory_space<vmem>>, vector<128x49xf32>
    tpu.vector_store %arg6[%c0_4, %c0_5], %3 {strides = array<i32>} : memref<1152x49xf32, #tpu.memory_space<vmem>>, vector<128x49xf32>,
    %c1 = arith.constant 1 : index
    %c0_6 = arith.constant 0 : index
    %c0_7 = arith.constant 0 : index
    %5 = vector.load %arg0[%c1, %c0_6, %c0_7] : memref<9x49x49xf32, #tpu.memory_space<vmem>>, vector<1x49x49xf32>
    %6 = vector.shape_cast %5 : vector<1x49x49xf32> to vector<49x49xf32>
    %cst_8 = arith.constant dense<0.000000e+00> : vector<128x49xf32>
    %7 = tpu.matmul %0, %6, %cst_8 {dimension_numbers = #tpu.dot_dimension_numbers<[1], [0], [0], [1], [0, 0, 1, 1], [], []>} : vector<128x49xf32>, vector<49x49xf32>, vector<128x49xf32> -> vector<128x49xf32>
    %c128 = arith.constant 128 : index
    %c0_9 = arith.constant 0 : index
    %8 = vector.load %arg6[%c128, %c0_9] : memref<1152x49xf32, #tpu.memory_space<vmem>>, vector<128x49xf32>
    tpu.vector_store %arg6[%c128, %c0_9], %7 {strides = array<i32>} : memref<1152x49xf32, #tpu.memory_space<vmem>>, vector<128x49xf32>,
    %c2 = arith.constant 2 : index
    %c0_10 = arith.constant 0 : index
    %c0_11 = arith.constant 0 : index
    %9 = vector.load %arg0[%c2, %c0_10, %c0_11] : memref<9x49x49xf32, #tpu.memory_space<vmem>>, vector<1x49x49xf32>
    %10 = vector.shape_cast %9 : vector<1x49x49xf32> to vector<49x49xf32>
    %cst_12 = arith.constant dense<0.000000e+00> : vector<128x49xf32>
    %11 = tpu.matmul %0, %10, %cst_12 {dimension_numbers = #tpu.dot_dimension_numbers<[1], [0], [0], [1], [0, 0, 1, 1], [], []>} : vector<128x49xf32>, vector<49x49xf32>, vector<128x49xf32> -> vector<128x49xf32>
    %c256 = arith.constant 256 : index
    %c0_13 = arith.constant 0 : index
    %12 = vector.load %arg6[%c256, %c0_13] : memref<1152x49xf32, #tpu.memory_space<vmem>>, vector<128x49xf32>
    tpu.vector_store %arg6[%c256, %c0_13], %11 {strides = array<i32>} : memref<1152x49xf32, #tpu.memory_space<vmem>>, vector<128x49xf32>,
    %c3 = arith.constant 3 : index
    %c0_14 = arith.constant 0 : index
    %c0_15 = arith.constant 0 : index
    %13 = vector.load %arg0[%c3, %c0_14, %c0_15] : memref<9x49x49xf32, #tpu.memory_space<vmem>>, vector<1x49x49xf32>
    %14 = vector.shape_cast %13 : vector<1x49x49xf32> to vector<49x49xf32>
    %cst_16 = arith.constant dense<0.000000e+00> : vector<128x49xf32>
    %15 = tpu.matmul %0, %14, %cst_16 {dimension_numbers = #tpu.dot_dimension_numbers<[1], [0], [0], [1], [0, 0, 1, 1], [], []>} : vector<128x49xf32>, vector<49x49xf32>, vector<128x49xf32> -> vector<128x49xf32>
    %c384 = arith.constant 384 : index
    %c0_17 = arith.constant 0 : index
    %16 = vector.load %arg6[%c384, %c0_17] : memref<1152x49xf32, #tpu.memory_space<vmem>>, vector<128x49xf32>
    tpu.vector_store %arg6[%c384, %c0_17], %15 {strides = array<i32>} : memref<1152x49xf32, #tpu.memory_space<vmem>>, vector<128x49xf32>,
    %c4 = arith.constant 4 : index
    %c0_18 = arith.constant 0 : index
    %c0_19 = arith.constant 0 : index
    %17 = vector.load %arg0[%c4, %c0_18, %c0_19] : memref<9x49x49xf32, #tpu.memory_space<vmem>>, vector<1x49x49xf32>
    %18 = vector.shape_cast %17 : vector<1x49x49xf32> to vector<49x49xf32>
    %cst_20 = arith.constant dense<0.000000e+00> : vector<128x49xf32>
    %19 = tpu.matmul %0, %18, %cst_20 {dimension_numbers = #tpu.dot_dimension_numbers<[1], [0], [0], [1], [0, 0, 1, 1], [], []>} : vector<128x49xf32>, vector<49x49xf32>, vector<128x49xf32> -> vector<128x49xf32>
    %c512 = arith.constant 512 : index
    %c0_21 = arith.constant 0 : index
    %20 = vector.load %arg6[%c512, %c0_21] : memref<1152x49xf32, #tpu.memory_space<vmem>>, vector<128x49xf32>
    tpu.vector_store %arg6[%c512, %c0_21], %19 {strides = array<i32>} : memref<1152x49xf32, #tpu.memory_space<vmem>>, vector<128x49xf32>,
    %c5 = arith.constant 5 : index
    %c0_22 = arith.constant 0 : index
    %c0_23 = arith.constant 0 : index
    %21 = vector.load %arg0[%c5, %c0_22, %c0_23] : memref<9x49x49xf32, #tpu.memory_space<vmem>>, vector<1x49x49xf32>
    %22 = vector.shape_cast %21 : vector<1x49x49xf32> to vector<49x49xf32>
    %cst_24 = arith.constant dense<0.000000e+00> : vector<128x49xf32>
    %23 = tpu.matmul %0, %22, %cst_24 {dimension_numbers = #tpu.dot_dimension_numbers<[1], [0], [0], [1], [0, 0, 1, 1], [], []>} : vector<128x49xf32>, vector<49x49xf32>, vector<128x49xf32> -> vector<128x49xf32>
    %c640 = arith.constant 640 : index
    %c0_25 = arith.constant 0 : index
    %24 = vector.load %arg6[%c640, %c0_25] : memref<1152x49xf32, #tpu.memory_space<vmem>>, vector<128x49xf32>
    tpu.vector_store %arg6[%c640, %c0_25], %23 {strides = array<i32>} : memref<1152x49xf32, #tpu.memory_space<vmem>>, vector<128x49xf32>,
    %c6 = arith.constant 6 : index
    %c0_26 = arith.constant 0 : index
    %c0_27 = arith.constant 0 : index
    %25 = vector.load %arg0[%c6, %c0_26, %c0_27] : memref<9x49x49xf32, #tpu.memory_space<vmem>>, vector<1x49x49xf32>
    %26 = vector.shape_cast %25 : vector<1x49x49xf32> to vector<49x49xf32>
    %cst_28 = arith.constant dense<0.000000e+00> : vector<128x49xf32>
    %27 = tpu.matmul %0, %26, %cst_28 {dimension_numbers = #tpu.dot_dimension_numbers<[1], [0], [0], [1], [0, 0, 1, 1], [], []>} : vector<128x49xf32>, vector<49x49xf32>, vector<128x49xf32> -> vector<128x49xf32>
    %c768 = arith.constant 768 : index
    %c0_29 = arith.constant 0 : index
    %28 = vector.load %arg6[%c768, %c0_29] : memref<1152x49xf32, #tpu.memory_space<vmem>>, vector<128x49xf32>
    tpu.vector_store %arg6[%c768, %c0_29], %27 {strides = array<i32>} : memref<1152x49xf32, #tpu.memory_space<vmem>>, vector<128x49xf32>,
    %c7 = arith.constant 7 : index
    %c0_30 = arith.constant 0 : index
    %c0_31 = arith.constant 0 : index
    %29 = vector.load %arg0[%c7, %c0_30, %c0_31] : memref<9x49x49xf32, #tpu.memory_space<vmem>>, vector<1x49x49xf32>
    %30 = vector.shape_cast %29 : vector<1x49x49xf32> to vector<49x49xf32>
    %cst_32 = arith.constant dense<0.000000e+00> : vector<128x49xf32>
    %31 = tpu.matmul %0, %30, %cst_32 {dimension_numbers = #tpu.dot_dimension_numbers<[1], [0], [0], [1], [0, 0, 1, 1], [], []>} : vector<128x49xf32>, vector<49x49xf32>, vector<128x49xf32> -> vector<128x49xf32>
    %c896 = arith.constant 896 : index
    %c0_33 = arith.constant 0 : index
    %32 = vector.load %arg6[%c896, %c0_33] : memref<1152x49xf32, #tpu.memory_space<vmem>>, vector<128x49xf32>
    tpu.vector_store %arg6[%c896, %c0_33], %31 {strides = array<i32>} : memref<1152x49xf32, #tpu.memory_space<vmem>>, vector<128x49xf32>,
    %c8 = arith.constant 8 : index
    %c0_34 = arith.constant 0 : index
    %c0_35 = arith.constant 0 : index
    %33 = vector.load %arg0[%c8, %c0_34, %c0_35] : memref<9x49x49xf32, #tpu.memory_space<vmem>>, vector<1x49x49xf32>
    %34 = vector.shape_cast %33 : vector<1x49x49xf32> to vector<49x49xf32>
    %cst_36 = arith.constant dense<0.000000e+00> : vector<128x49xf32>
    %35 = tpu.matmul %0, %34, %cst_36 {dimension_numbers = #tpu.dot_dimension_numbers<[1], [0], [0], [1], [0, 0, 1, 1], [], []>} : vector<128x49xf32>, vector<49x49xf32>, vector<128x49xf32> -> vector<128x49xf32>
    %c1024 = arith.constant 1024 : index
    %c0_37 = arith.constant 0 : index
    %36 = vector.load %arg6[%c1024, %c0_37] : memref<1152x49xf32, #tpu.memory_space<vmem>>, vector<128x49xf32>
    tpu.vector_store %arg6[%c1024, %c0_37], %35 {strides = array<i32>} : memref<1152x49xf32, #tpu.memory_space<vmem>>, vector<128x49xf32>,
    %c0_38 = arith.constant 0 : index
    %c0_39 = arith.constant 0 : index
    %37 = vector.load %arg1[%c0_38, %c0_39] : memref<32x1152xf32, #tpu.memory_space<vmem>>, vector<32x1152xf32>
    %c0_40 = arith.constant 0 : index
    %c0_41 = arith.constant 0 : index
    %38 = vector.load %arg6[%c0_40, %c0_41] : memref<1152x49xf32, #tpu.memory_space<vmem>>, vector<1152x49xf32>
    %cst_42 = arith.constant dense<0.000000e+00> : vector<32x49xf32>
    %39 = tpu.matmul %37, %38, %cst_42 {dimension_numbers = #tpu.dot_dimension_numbers<[1], [0], [0], [1], [0, 0, 1, 1], [], []>} : vector<32x1152xf32>, vector<1152x49xf32>, vector<32x49xf32> -> vector<32x49xf32>
    %c0_43 = arith.constant 0 : index
    %c0_44 = arith.constant 0 : index
    %40 = vector.load %arg3[%c0_43, %c0_44] : memref<896x49xf32, #tpu.memory_space<vmem>>, vector<896x49xf32>
    %c0_45 = arith.constant 0 : index
    %c0_46 = arith.constant 0 : index
    %41 = vector.load %arg5[%c0_45, %c0_46] : memref<960x49xf32, #tpu.memory_space<vmem>>, vector<896x49xf32>
    tpu.vector_store %arg5[%c0_45, %c0_46], %40 {strides = array<i32>} : memref<960x49xf32, #tpu.memory_space<vmem>>, vector<896x49xf32>,
    %c896_47 = arith.constant 896 : index
    %c0_48 = arith.constant 0 : index
    %42 = vector.load %arg5[%c896_47, %c0_48] : memref<960x49xf32, #tpu.memory_space<vmem>>, vector<32x49xf32>
    tpu.vector_store %arg5[%c896_47, %c0_48], %39 {strides = array<i32>} : memref<960x49xf32, #tpu.memory_space<vmem>>, vector<32x49xf32>,
    %c0_49 = arith.constant 0 : index
    %c0_50 = arith.constant 0 : index
    %43 = vector.load %arg4[%c0_49, %c0_50] : memref<32x49xf32, #tpu.memory_space<vmem>>, vector<32x49xf32>
    %c928 = arith.constant 928 : index
    %c0_51 = arith.constant 0 : index
    %44 = vector.load %arg5[%c928, %c0_51] : memref<960x49xf32, #tpu.memory_space<vmem>>, vector<32x49xf32>
    tpu.vector_store %arg5[%c928, %c0_51], %43 {strides = array<i32>} : memref<960x49xf32, #tpu.memory_space<vmem>>, vector<32x49xf32>,
    return
  }
}

</mosaic_0001>

<llo_original>
// kernel: tpu_custom_call.1
$region0: #{tpu_custom_call.1}
  #allocation0 [shape = 'u32[]', space=smem, size = 0x4, offset = 0x4, fixed_abs, tag = 'smem constant byte address 0x4 - core index']
  #allocation1 [shape = 'u32[144,128]{1,0:T(1,128)}', space=vmem, size = 0x12000, scoped, tag = 'internal scratch']
  #allocation2 [shape = 'f32[1152,49]{1,0:T(8,128)}', space=vmem, size = 0x90000, scoped, tag = 'scratch operand']
  %s0 = inlined_call_operand.vmem [shape: f32[9,49,49], index: 0, kind: input, shape index: {}]
  %s1 = inlined_call_operand.vmem [shape: f32[32,1152], index: 1, kind: input, shape index: {}]
  %s2 = inlined_call_operand.vmem [shape: f32[128,49], index: 2, kind: input, shape index: {}]
  %s3 = inlined_call_operand.vmem [shape: f32[896,49], index: 3, kind: input, shape index: {}]
  %s4 = inlined_call_operand.vmem [shape: f32[32,49], index: 4, kind: input, shape index: {}]
  %s5 = inlined_call_operand.vmem [shape: f32[960,49], index: 5, kind: output, shape index: {}]
  %s6 = sld [smem:[#allocation0]]
  $region30: #{tpu_custom_call.1} parent=0
    _
  %s8 = ssub.s32 1, %s6
  %s9 = scalar_select 0, %s8, %s6
  // Predicated region
  $region2: #{tpu_custom_call.1} parent=0 // pred_check
    _
  $region3: #{tpu_custom_call.1} parent=0 // pred_check_branch
    %11 = sbr.rel (0) target = $region5
  $region4: #{tpu_custom_call.1} parent=0 // pred_region
    _
  $region5: #{tpu_custom_call.1} parent=0 // pred_fallthru
    _
  // Predicated region
  $region6: #{tpu_custom_call.1} parent=0 // pred_check
    _
  $region7: #{tpu_custom_call.1} parent=0 // pred_check_branch
    %13 = sbr.rel (0) target = $region9
  $region8: #{tpu_custom_call.1} parent=0 // pred_region
    _
  $region9: #{tpu_custom_call.1} parent=0 // pred_fallthru
    _
  // Predicated region
  $region10: #{tpu_custom_call.1} parent=0 // pred_check
    _
  $region11: #{tpu_custom_call.1} parent=0 // pred_check_branch
    %15 = sbr.rel (0) target = $region13
  $region12: #{tpu_custom_call.1} parent=0 // pred_region
    _
  $region13: #{tpu_custom_call.1} parent=0 // pred_fallthru
    _
  // Predicated region
  $region14: #{tpu_custom_call.1} parent=0 // pred_check
    _
  $region15: #{tpu_custom_call.1} parent=0 // pred_check_branch
    %17 = sbr.rel (0) target = $region17
  $region16: #{tpu_custom_call.1} parent=0 // pred_region
    _
  $region17: #{tpu_custom_call.1} parent=0 // pred_fallthru
    _
  // Predicated region
  $region18: #{tpu_custom_call.1} parent=0 // pred_check
    _
  $region19: #{tpu_custom_call.1} parent=0 // pred_check_branch
    %19 = sbr.rel (0) target = $region21
  $region20: #{tpu_custom_call.1} parent=0 // pred_region
    _
  $region21: #{tpu_custom_call.1} parent=0 // pred_fallthru
    _
  %v20 = vld [vmem:[%s2] sm:$0xff]
  %v21 = vld [vmem:[%s2 + $0x8] sm:$0xff]
  %v22 = vld [vmem:[%s2 + $0x10] sm:$0xff]
  %v23 = vld [vmem:[%s2 + $0x18] sm:$0xff]
  %v24 = vld [vmem:[%s2 + $0x20] sm:$0xff]
  %v25 = vld [vmem:[%s2 + $0x28] sm:$0xff]
  %v26 = vld [vmem:[%s2 + $0x30] sm:$0xff]
  %v27 = vld [vmem:[%s2 + $0x38] sm:$0xff]
  %v28 = vld [vmem:[%s2 + $0x40] sm:$0xff]
  %v29 = vld [vmem:[%s2 + $0x48] sm:$0xff]
  %v30 = vld [vmem:[%s2 + $0x50] sm:$0xff]
  %v31 = vld [vmem:[%s2 + $0x58] sm:$0xff]
  %v32 = vld [vmem:[%s2 + $0x60] sm:$0xff]
  %v33 = vld [vmem:[%s2 + $0x68] sm:$0xff]
  %v34 = vld [vmem:[%s2 + $0x70] sm:$0xff]
  %v35 = vld [vmem:[%s2 + $0x78] sm:$0xff]
  %v36 = vld [vmem:[%s0] sm:$0xff]
  %v37 = vld [vmem:[%s0 + $0x8] sm:$0xff]
  %v38 = vld [vmem:[%s0 + $0x10] sm:$0xff]
  %v39 = vld [vmem:[%s0 + $0x18] sm:$0xff]
  %v40 = vld [vmem:[%s0 + $0x20] sm:$0xff]
  %v41 = vld [vmem:[%s0 + $0x28] sm:$0xff]
  %v42 = vld [vmem:[%s0 + $0x30] sm:$0x1]
  %vm43 = vcmask 400384
  %v45 = vsel %vm43, %v20, 0
  %v48 = vsel %vm43, %v21, 0
  %v51 = vsel %vm43, %v22, 0
  %v54 = vsel %vm43, %v23, 0
  %v57 = vsel %vm43, %v24, 0
  %v60 = vsel %vm43, %v25, 0
  %v63 = vsel %vm43, %v26, 0
  %v66 = vsel %vm43, %v27, 0
  %v69 = vsel %vm43, %v28, 0
  %v72 = vsel %vm43, %v29, 0
  %v75 = vsel %vm43, %v30, 0
  %v78 = vsel %vm43, %v31, 0
  %v81 = vsel %vm43, %v32, 0
  %v84 = vsel %vm43, %v33, 0
  %v87 = vsel %vm43, %v34, 0
  %v90 = vsel %vm43, %v35, 0
  %vm92 = vcmask 1040384
  %v94 = vsel %vm92, %v42, 0
  %96 = vmatprep.subr.mxu0 0.0
  %97 = vmatpush1.msra.mxu0 %v36
  %98 = vmatprep.subr.mxu0 0.0
  %99 = vmatpush1.msra.mxu0 %v37
  %100 = vmatprep.subr.mxu0 0.0
  %101 = vmatpush1.msra.mxu0 %v38
  %102 = vmatprep.subr.mxu0 0.0
  %103 = vmatpush1.msra.mxu0 %v39
  %104 = vmatprep.subr.mxu0 0.0
  %105 = vmatpush1.msra.mxu0 %v40
  %106 = vmatprep.subr.mxu0 0.0
  %107 = vmatpush1.msra.mxu0 %v41
  %108 = vmatprep.subr.mxu0 0.0
  %109 = vmatpush1.msra.mxu0 %v94
  %110 = vmatprep.subr.mxu0 0.0
  %111 = vmatpush1.msra.mxu0 0.0
  %112 = vmatprep.subr.mxu0 0.0
  %113 = vmatpush1.msra.mxu0 0.0
  %114 = vmatprep.subr.mxu0 0.0
  %115 = vmatpush1.msra.mxu0 0.0
  %116 = vmatprep.subr.mxu0 0.0
  %117 = vmatpush1.msra.mxu0 0.0
  %118 = vmatprep.subr.mxu0 0.0
  %119 = vmatpush1.msra.mxu0 0.0
  %120 = vmatprep.subr.mxu0 0.0
  %121 = vmatpush1.msra.mxu0 0.0
  %122 = vmatprep.subr.mxu0 0.0
  %123 = vmatpush1.msra.mxu0 0.0
  %124 = vmatprep.subr.mxu0 0.0
  %125 = vmatpush1.msra.mxu0 0.0
  %126 = vmatprep.subr.mxu0 0.0
  %127 = vmatpush1.msra.mxu0 0.0
  %128 = vmatprep.subr.mxu0 0.0
  %129 = vmatpush1.msra.mxu0 0.0
  %130 = vmatprep.subr.mxu0 0.0
  %131 = vmatpush1.msra.mxu0 0.0
  %132 = vmatprep.subr.mxu0 0.0
  %133 = vmatpush1.msra.mxu0 0.0
  %134 = vmatprep.subr.mxu0 0.0
  %135 = vmatpush1.msra.mxu0 0.0
  %136 = vmatprep.subr.mxu0 0.0
  %137 = vmatpush1.msra.mxu0 0.0
  %138 = vmatprep.subr.mxu0 0.0
  %139 = vmatpush1.msra.mxu0 0.0
  %140 = vmatprep.subr.mxu0 0.0
  %141 = vmatpush1.msra.mxu0 0.0
  %142 = vmatprep.subr.mxu0 0.0
  %143 = vmatpush1.msra.mxu0 0.0
  %144 = vmatprep.subr.mxu0 0.0
  %145 = vmatpush1.msra.mxu0 0.0
  %146 = vmatprep.subr.mxu0 0.0
  %147 = vmatpush1.msra.mxu0 0.0
  %148 = vmatprep.subr.mxu0 0.0
  %149 = vmatpush1.msra.mxu0 0.0
  %150 = vmatprep.subr.mxu0 0.0
  %151 = vmatpush1.msra.mxu0 0.0
  %152 = vmatprep.subr.mxu0 0.0
  %153 = vmatpush1.msra.mxu0 0.0
  %154 = vmatprep.subr.mxu0 0.0
  %155 = vmatpush1.msra.mxu0 0.0
  %156 = vmatprep.subr.mxu0 0.0
  %157 = vmatpush1.msra.mxu0 0.0
  %158 = vmatprep.subr.mxu0 0.0
  %159 = vmatpush1.msra.mxu0 0.0
  %160 = vmatprep.mubr.f32.mxu0 0.0
  %161 = vmatmul.mubr.f32.gmra.mrb[0].mxu0 %v45
  %v162 = vpop.f32.mrb[0].mxu0
  %v163 = vadd.f32 0.0, %v162
  %v164 = vpop.f32.mrb[0].mxu0
  %165 = vmatprep.mubr.f32.mxu0 0.0
  %166 = vmatmul.mubr.f32.gmra.mrb[0].mxu0 %v48
  %v167 = vpop.f32.mrb[0].mxu0
  %v168 = vadd.f32 0.0, %v167
  %v169 = vpop.f32.mrb[0].mxu0
  %170 = vmatprep.mubr.f32.mxu0 0.0
  %171 = vmatmul.mubr.f32.gmra.mrb[0].mxu0 %v51
  %v172 = vpop.f32.mrb[0].mxu0
  %v173 = vadd.f32 0.0, %v172
  %v174 = vpop.f32.mrb[0].mxu0
  %175 = vmatprep.mubr.f32.mxu0 0.0
  %176 = vmatmul.mubr.f32.gmra.mrb[0].mxu0 %v54
  %v177 = vpop.f32.mrb[0].mxu0
  %v178 = vadd.f32 0.0, %v177
  %v179 = vpop.f32.mrb[0].mxu0
  %180 = vmatprep.mubr.f32.mxu0 0.0
  %181 = vmatmul.mubr.f32.gmra.mrb[0].mxu0 %v57
  %v182 = vpop.f32.mrb[0].mxu0
  %v183 = vadd.f32 0.0, %v182
  %v184 = vpop.f32.mrb[0].mxu0
  %185 = vmatprep.mubr.f32.mxu0 0.0
  %186 = vmatmul.mubr.f32.gmra.mrb[0].mxu0 %v60
  %v187 = vpop.f32.mrb[0].mxu0
  %v188 = vadd.f32 0.0, %v187
  %v189 = vpop.f32.mrb[0].mxu0
  %190 = vmatprep.mubr.f32.mxu0 0.0
  %191 = vmatmul.mubr.f32.gmra.mrb[0].mxu0 %v63
  %v192 = vpop.f32.mrb[0].mxu0
  %v193 = vadd.f32 0.0, %v192
  %v194 = vpop.f32.mrb[0].mxu0
  %195 = vmatprep.mubr.f32.mxu0 0.0
  %196 = vmatmul.mubr.f32.gmra.mrb[0].mxu0 %v66
  %v197 = vpop.f32.mrb[0].mxu0
  %v198 = vadd.f32 0.0, %v197
  %v199 = vpop.f32.mrb[0].mxu0
  %200 = vmatprep.mubr.f32.mxu0 0.0
  %201 = vmatmul.mubr.f32.gmra.mrb[0].mxu0 %v69
  %v202 = vpop.f32.mrb[0].mxu0
  %v203 = vadd.f32 0.0, %v202
  %v204 = vpop.f32.mrb[0].mxu0
  %205 = vmatprep.mubr.f32.mxu0 0.0
  %206 = vmatmul.mubr.f32.gmra.mrb[0].mxu0 %v72
  %v207 = vpop.f32.mrb[0].mxu0
  %v208 = vadd.f32 0.0, %v207
  %v209 = vpop.f32.mrb[0].mxu0
  %210 = vmatprep.mubr.f32.mxu0 0.0
  %211 = vmatmul.mubr.f32.gmra.mrb[0].mxu0 %v75
  %v212 = vpop.f32.mrb[0].mxu0
  %v213 = vadd.f32 0.0, %v212
  %v214 = vpop.f32.mrb[0].mxu0
  %215 = vmatprep.mubr.f32.mxu0 0.0
  %216 = vmatmul.mubr.f32.gmra.mrb[0].mxu0 %v78
  %v217 = vpop.f32.mrb[0].mxu0
  %v218 = vadd.f32 0.0, %v217
  %v219 = vpop.f32.mrb[0].mxu0
  %220 = vmatprep.mubr.f32.mxu0 0.0
  %221 = vmatmul.mubr.f32.gmra.mrb[0].mxu0 %v81
  %v222 = vpop.f32.mrb[0].mxu0
  %v223 = vadd.f32 0.0, %v222
  %v224 = vpop.f32.mrb[0].mxu0
  %225 = vmatprep.mubr.f32.mxu0 0.0
  %226 = vmatmul.mubr.f32.gmra.mrb[0].mxu0 %v84
  %v227 = vpop.f32.mrb[0].mxu0
  %v228 = vadd.f32 0.0, %v227
  %v229 = vpop.f32.mrb[0].mxu0
  %230 = vmatprep.mubr.f32.mxu0 0.0
  %231 = vmatmul.mubr.f32.gmra.mrb[0].mxu0 %v87
  %v232 = vpop.f32.mrb[0].mxu0
  %v233 = vadd.f32 0.0, %v232
  %v234 = vpop.f32.mrb[0].mxu0
  %235 = vmatprep.mubr.f32.mxu0 0.0
  %236 = vmatmul.mubr.f32.gmra.mrb[0].mxu0 %v90
  %v237 = vpop.f32.mrb[0].mxu0
  %v238 = vadd.f32 0.0, %v237
  %v239 = vpop.f32.mrb[0].mxu0
  %240 = vdwg.mxu0
  %241 = vst.msk [vmem:[#allocation2] sm:$0xff] %vm43, %v163
  %242 = vst.msk [vmem:[#allocation2 + $0x8] sm:$0xff] %vm43, %v168
  %243 = vst.msk [vmem:[#allocation2 + $0x10] sm:$0xff] %vm43, %v173
  %244 = vst.msk [vmem:[#allocation2 + $0x18] sm:$0xff] %vm43, %v178
  %245 = vst.msk [vmem:[#allocation2 + $0x20] sm:$0xff] %vm43, %v183
  %246 = vst.msk [vmem:[#allocation2 + $0x28] sm:$0xff] %vm43, %v188
  %247 = vst.msk [vmem:[#allocation2 + $0x30] sm:$0xff] %vm43, %v193
  %248 = vst.msk [vmem:[#allocation2 + $0x38] sm:$0xff] %vm43, %v198
  %249 = vst.msk [vmem:[#allocation2 + $0x40] sm:$0xff] %vm43, %v203
  %250 = vst.msk [vmem:[#allocation2 + $0x48] sm:$0xff] %vm43, %v208
  %251 = vst.msk [vmem:[#allocation2 + $0x50] sm:$0xff] %vm43, %v213
  %252 = vst.msk [vmem:[#allocation2 + $0x58] sm:$0xff] %vm43, %v218
  %253 = vst.msk [vmem:[#allocation2 + $0x60] sm:$0xff] %vm43, %v223
  %254 = vst.msk [vmem:[#allocation2 + $0x68] sm:$0xff] %vm43, %v228
  %255 = vst.msk [vmem:[#allocation2 + $0x70] sm:$0xff] %vm43, %v233
  %256 = vst.msk [vmem:[#allocation2 + $0x78] sm:$0xff] %vm43, %v238
  %s257 = scalar_lea.vmem %s0, 56
  %v258 = vld [vmem:[%s257] sm:$0xff]
  %v259 = vld [vmem:[%s257 + $0x8] sm:$0xff]
  %v260 = vld [vmem:[%s257 + $0x10] sm:$0xff]
  %v261 = vld [vmem:[%s257 + $0x18] sm:$0xff]
  %v262 = vld [vmem:[%s257 + $0x20] sm:$0xff]
  %v263 = vld [vmem:[%s257 + $0x28] sm:$0xff]
  %v264 = vld [vmem:[%s257 + $0x30] sm:$0x1]
  %v266 = vsel %vm92, %v264, 0
  %268 = vmatprep.subr.mxu0 0.0
  %269 = vmatpush1.msra.mxu0 %v258
  %270 = vmatprep.subr.mxu0 0.0
  %271 = vmatpush1.msra.mxu0 %v259
  %272 = vmatprep.subr.mxu0 0.0
  %273 = vmatpush1.msra.mxu0 %v260
  %274 = vmatprep.subr.mxu0 0.0
  %275 = vmatpush1.msra.mxu0 %v261
  %276 = vmatprep.subr.mxu0 0.0
  %277 = vmatpush1.msra.mxu0 %v262
  %278 = vmatprep.subr.mxu0 0.0
  %279 = vmatpush1.msra.mxu0 %v263
  %280 = vmatprep.subr.mxu0 0.0
  %281 = vmatpush1.msra.mxu0 %v266
  %282 = vmatprep.subr.mxu0 0.0
  %283 = vmatpush1.msra.mxu0 0.0
  %284 = vmatprep.subr.mxu0 0.0
  %285 = vmatpush1.msra.mxu0 0.0
  %286 = vmatprep.subr.mxu0 0.0
  %287 = vmatpush1.msra.mxu0 0.0
  %288 = vmatprep.subr.mxu0 0.0
  %289 = vmatpush1.msra.mxu0 0.0
  %290 = vmatprep.subr.mxu0 0.0
  %291 = vmatpush1.msra.mxu0 0.0
  %292 = vmatprep.subr.mxu0 0.0
  %293 = vmatpush1.msra.mxu0 0.0
  %294 = vmatprep.subr.mxu0 0.0
  %295 = vmatpush1.msra.mxu0 0.0
  %296 = vmatprep.subr.mxu0 0.0
  %297 = vmatpush1.msra.mxu0 0.0
  %298 = vmatprep.subr.mxu0 0.0
  %299 = vmatpush1.msra.mxu0 0.0
  %300 = vmatprep.subr.mxu0 0.0
  %301 = vmatpush1.msra.mxu0 0.0
  %302 = vmatprep.subr.mxu0 0.0
  %303 = vmatpush1.msra.mxu0 0.0
  %304 = vmatprep.subr.mxu0 0.0
  %305 = vmatpush1.msra.mxu0 0.0
  %306 = vmatprep.subr.mxu0 0.0
  %307 = vmatpush1.msra.mxu0 0.0
  %308 = vmatprep.subr.mxu0 0.0
  %309 = vmatpush1.msra.mxu0 0.0
  %310 = vmatprep.subr.mxu0 0.0
  %311 = vmatpush1.msra.mxu0 0.0
  %312 = vmatprep.subr.mxu0 0.0
  %313 = vmatpush1.msra.mxu0 0.0
  %314 = vmatprep.subr.mxu0 0.0
  %315 = vmatpush1.msra.mxu0 0.0
  %316 = vmatprep.subr.mxu0 0.0
  %317 = vmatpush1.msra.mxu0 0.0
  %318 = vmatprep.subr.mxu0 0.0
  %319 = vmatpush1.msra.mxu0 0.0
  %320 = vmatprep.subr.mxu0 0.0
  %321 = vmatpush1.msra.mxu0 0.0
  %322 = vmatprep.subr.mxu0 0.0
  %323 = vmatpush1.msra.mxu0 0.0
  %324 = vmatprep.subr.mxu0 0.0
  %325 = vmatpush1.msra.mxu0 0.0
  %326 = vmatprep.subr.mxu0 0.0
  %327 = vmatpush1.msra.mxu0 0.0
  %328 = vmatprep.subr.mxu0 0.0
  %329 = vmatpush1.msra.mxu0 0.0
  %330 = vmatprep.subr.mxu0 0.0
  %331 = vmatpush1.msra.mxu0 0.0
  %332 = vmatprep.mubr.f32.mxu0 0.0
  %333 = vmatmul.mubr.f32.gmra.mrb[0].mxu0 %v45
  %v334 = vpop.f32.mrb[0].mxu0
  %v335 = vadd.f32 0.0, %v334
  %v336 = vpop.f32.mrb[0].mxu0
  %337 = vmatprep.mubr.f32.mxu0 0.0
  %338 = vmatmul.mubr.f32.gmra.mrb[0].mxu0 %v48
  %v339 = vpop.f32.mrb[0].mxu0
  %v340 = vadd.f32 0.0, %v339
  %v341 = vpop.f32.mrb[0].mxu0
  %342 = vmatprep.mubr.f32.mxu0 0.0
  %343 = vmatmul.mubr.f32.gmra.mrb[0].mxu0 %v51
  %v344 = vpop.f32.mrb[0].mxu0
  %v345 = vadd.f32 0.0, %v344
  %v346 = vpop.f32.mrb[0].mxu0
  %347 = vmatprep.mubr.f32.mxu0 0.0
  %348 = vmatmul.mubr.f32.gmra.mrb[0].mxu0 %v54
  %v349 = vpop.f32.mrb[0].mxu0
  %v350 = vadd.f32 0.0, %v349
  %v351 = vpop.f32.mrb[0].mxu0
  %352 = vmatprep.mubr.f32.mxu0 0.0
  %353 = vmatmul.mubr.f32.gmra.mrb[0].mxu0 %v57
  %v354 = vpop.f32.mrb[0].mxu0
  %v355 = vadd.f32 0.0, %v354
  %v356 = vpop.f32.mrb[0].mxu0
  %357 = vmatprep.mubr.f32.mxu0 0.0
  %358 = vmatmul.mubr.f32.gmra.mrb[0].mxu0 %v60
  %v359 = vpop.f32.mrb[0].mxu0
  %v360 = vadd.f32 0.0, %v359
  %v361 = vpop.f32.mrb[0].mxu0
  %362 = vmatprep.mubr.f32.mxu0 0.0
  %363 = vmatmul.mubr.f32.gmra.mrb[0].mxu0 %v63
  %v364 = vpop.f32.mrb[0].mxu0
  %v365 = vadd.f32 0.0, %v364
  %v366 = vpop.f32.mrb[0].mxu0
  %367 = vmatprep.mubr.f32.mxu0 0.0
  %368 = vmatmul.mubr.f32.gmra.mrb[0].mxu0 %v66
  %v369 = vpop.f32.mrb[0].mxu0
  %v370 = vadd.f32 0.0, %v369
  %v371 = vpop.f32.mrb[0].mxu0
  %372 = vmatprep.mubr.f32.mxu0 0.0
  %373 = vmatmul.mubr.f32.gmra.mrb[0].mxu0 %v69
  %v374 = vpop.f32.mrb[0].mxu0
  %v375 = vadd.f32 0.0, %v374
  %v376 = vpop.f32.mrb[0].mxu0
  %377 = vmatprep.mubr.f32.mxu0 0.0
  %378 = vmatmul.mubr.f32.gmra.mrb[0].mxu0 %v72
  %v379 = vpop.f32.mrb[0].mxu0
  %v380 = vadd.f32 0.0, %v379
  %v381 = vpop.f32.mrb[0].mxu0
  %382 = vmatprep.mubr.f32.mxu0 0.0
  %383 = vmatmul.mubr.f32.gmra.mrb[0].mxu0 %v75
  %v384 = vpop.f32.mrb[0].mxu0
  %v385 = vadd.f32 0.0, %v384
  %v386 = vpop.f32.mrb[0].mxu0
  %387 = vmatprep.mubr.f32.mxu0 0.0
  %388 = vmatmul.mubr.f32.gmra.mrb[0].mxu0 %v78
  %v389 = vpop.f32.mrb[0].mxu0
  %v390 = vadd.f32 0.0, %v389
  %v391 = vpop.f32.mrb[0].mxu0
  %392 = vmatprep.mubr.f32.mxu0 0.0
  %393 = vmatmul.mubr.f32.gmra.mrb[0].mxu0 %v81
  %v394 = vpop.f32.mrb[0].mxu0
  %v395 = vadd.f32 0.0, %v394
  %v396 = vpop.f32.mrb[0].mxu0
  %397 = vmatprep.mubr.f32.mxu0 0.0
  %398 = vmatmul.mubr.f32.gmra.mrb[0].mxu0 %v84
  %v399 = vpop.f32.mrb[0].mxu0
  %v400 = vadd.f32 0.0, %v399
  %v401 = vpop.f32.mrb[0].mxu0
  %402 = vmatprep.mubr.f32.mxu0 0.0
  %403 = vmatmul.mubr.f32.gmra.mrb[0].mxu0 %v87
  %v404 = vpop.f32.mrb[0].mxu0
  %v405 = vadd.f32 0.0, %v404
  %v406 = vpop.f32.mrb[0].mxu0
  %407 = vmatprep.mubr.f32.mxu0 0.0
  %408 = vmatmul.mubr.f32.gmra.mrb[0].mxu0 %v90
  %v409 = vpop.f32.mrb[0].mxu0
  %v410 = vadd.f32 0.0, %v409
  %v411 = vpop.f32.mrb[0].mxu0
  %412 = vdwg.mxu0
  %413 = vst.msk [vmem:[#allocation2 + $0x80] sm:$0xff] %vm43, %v335
  %414 = vst.msk [vmem:[#allocation2 + $0x88] sm:$0xff] %vm43, %v340
  %415 = vst.msk [vmem:[#allocation2 + $0x90] sm:$0xff] %vm43, %v345
  %416 = vst.msk [vmem:[#allocation2 + $0x98] sm:$0xff] %vm43, %v350
  %417 = vst.msk [vmem:[#allocation2 + $0xa0] sm:$0xff] %vm43, %v355
  %418 = vst.msk [vmem:[#allocation2 + $0xa8] sm:$0xff] %vm43, %v360
  %419 = vst.msk [vmem:[#allocation2 + $0xb0] sm:$0xff] %vm43, %v365
  %420 = vst.msk [vmem:[#allocation2 + $0xb8] sm:$0xff] %vm43, %v370
  %421 = vst.msk [vmem:[#allocation2 + $0xc0] sm:$0xff] %vm43, %v375
  %422 = vst.msk [vmem:[#allocation2 + $0xc8] sm:$0xff] %vm43, %v380
  %423 = vst.msk [vmem:[#allocation2 + $0xd0] sm:$0xff] %vm43, %v385
  %424 = vst.msk [vmem:[#allocation2 + $0xd8] sm:$0xff] %vm43, %v390
  %425 = vst.msk [vmem:[#allocation2 + $0xe0] sm:$0xff] %vm43, %v395
  %426 = vst.msk [vmem:[#allocation2 + $0xe8] sm:$0xff] %vm43, %v400
  %427 = vst.msk [vmem:[#allocation2 + $0xf0] sm:$0xff] %vm43, %v405
  %428 = vst.msk [vmem:[#allocation2 + $0xf8] sm:$0xff] %vm43, %v410
  %s429 = scalar_lea.vmem %s0, 112
  %v430 = vld [vmem:[%s429] sm:$0xff]
  %v431 = vld [vmem:[%s429 + $0x8] sm:$0xff]
  %v432 = vld [vmem:[%s429 + $0x10] sm:$0xff]
  %v433 = vld [vmem:[%s429 + $0x18] sm:$0xff]
  %v434 = vld [vmem:[%s429 + $0x20] sm:$0xff]
  %v435 = vld [vmem:[%s429 + $0x28] sm:$0xff]
  %v436 = vld [vmem:[%s429 + $0x30] sm:$0x1]
  %v438 = vsel %vm92, %v436, 0
  %440 = vmatprep.subr.mxu0 0.0
  %441 = vmatpush1.msra.mxu0 %v430
  %442 = vmatprep.subr.mxu0 0.0
  %443 = vmatpush1.msra.mxu0 %v431
  %444 = vmatprep.subr.mxu0 0.0
  %445 = vmatpush1.msra.mxu0 %v432
  %446 = vmatprep.subr.mxu0 0.0
  %447 = vmatpush1.msra.mxu0 %v433
  %448 = vmatprep.subr.mxu0 0.0
  %449 = vmatpush1.msra.mxu0 %v434
  %450 = vmatprep.subr.mxu0 0.0
  %451 = vmatpush1.msra.mxu0 %v435
  %452 = vmatprep.subr.mxu0 0.0
  %453 = vmatpush1.msra.mxu0 %v438
  %454 = vmatprep.subr.mxu0 0.0
  %455 = vmatpush1.msra.mxu0 0.0
  %456 = vmatprep.subr.mxu0 0.0
  %457 = vmatpush1.msra.mxu0 0.0
  %458 = vmatprep.subr.mxu0 0.0
  %459 = vmatpush1.msra.mxu0 0.0
  %460 = vmatprep.subr.mxu0 0.0
  %461 = vmatpush1.msra.mxu0 0.0
  %462 = vmatprep.subr.mxu0 0.0
  %463 = vmatpush1.msra.mxu0 0.0
  %464 = vmatprep.subr.mxu0 0.0
  %465 = vmatpush1.msra.mxu0 0.0
  %466 = vmatprep.subr.mxu0 0.0
  %467 = vmatpush1.msra.mxu0 0.0
  %468 = vmatprep.subr.mxu0 0.0
  %469 = vmatpush1.msra.mxu0 0.0
  %470 = vmatprep.subr.mxu0 0.0
  %471 = vmatpush1.msra.mxu0 0.0
  %472 = vmatprep.subr.mxu0 0.0
  %473 = vmatpush1.msra.mxu0 0.0
  %474 = vmatprep.subr.mxu0 0.0
  %475 = vmatpush1.msra.mxu0 0.0
  %476 = vmatprep.subr.mxu0 0.0
  %477 = vmatpush1.msra.mxu0 0.0
  %478 = vmatprep.subr.mxu0 0.0
  %479 = vmatpush1.msra.mxu0 0.0
  %480 = vmatprep.subr.mxu0 0.0
  %481 = vmatpush1.msra.mxu0 0.0
  %482 = vmatprep.subr.mxu0 0.0
  %483 = vmatpush1.msra.mxu0 0.0
  %484 = vmatprep.subr.mxu0 0.0
  %485 = vmatpush1.msra.mxu0 0.0
  %486 = vmatprep.subr.mxu0 0.0
  %487 = vmatpush1.msra.mxu0 0.0
  %488 = vmatprep.subr.mxu0 0.0
  %489 = vmatpush1.msra.mxu0 0.0
  %490 = vmatprep.subr.mxu0 0.0
  %491 = vmatpush1.msra.mxu0 0.0
  %492 = vmatprep.subr.mxu0 0.0
  %493 = vmatpush1.msra.mxu0 0.0
  %494 = vmatprep.subr.mxu0 0.0
  %495 = vmatpush1.msra.mxu0 0.0
  %496 = vmatprep.subr.mxu0 0.0
  %497 = vmatpush1.msra.mxu0 0.0
  %498 = vmatprep.subr.mxu0 0.0
  %499 = vmatpush1.msra.mxu0 0.0
  %500 = vmatprep.subr.mxu0 0.0
  %501 = vmatpush1.msra.mxu0 0.0
  %502 = vmatprep.subr.mxu0 0.0
  %503 = vmatpush1.msra.mxu0 0.0
  %504 = vmatprep.mubr.f32.mxu0 0.0
  %505 = vmatmul.mubr.f32.gmra.mrb[0].mxu0 %v45
  %v506 = vpop.f32.mrb[0].mxu0
  %v507 = vadd.f32 0.0, %v506
  %v508 = vpop.f32.mrb[0].mxu0
  %509 = vmatprep.mubr.f32.mxu0 0.0
  %510 = vmatmul.mubr.f32.gmra.mrb[0].mxu0 %v48
  %v511 = vpop.f32.mrb[0].mxu0
  %v512 = vadd.f32 0.0, %v511
  %v513 = vpop.f32.mrb[0].mxu0
  %514 = vmatprep.mubr.f32.mxu0 0.0
  %515 = vmatmul.mubr.f32.gmra.mrb[0].mxu0 %v51
  %v516 = vpop.f32.mrb[0].mxu0
  %v517 = vadd.f32 0.0, %v516
  %v518 = vpop.f32.mrb[0].mxu0
  %519 = vmatprep.mubr.f32.mxu0 0.0
  %520 = vmatmul.mubr.f32.gmra.mrb[0].mxu0 %v54
  %v521 = vpop.f32.mrb[0].mxu0
  %v522 = vadd.f32 0.0, %v521
  %v523 = vpop.f32.mrb[0].mxu0
  %524 = vmatprep.mubr.f32.mxu0 0.0
  %525 = vmatmul.mubr.f32.gmra.mrb[0].mxu0 %v57
  %v526 = vpop.f32.mrb[0].mxu0
  %v527 = vadd.f32 0.0, %v526
  %v528 = vpop.f32.mrb[0].mxu0
  %529 = vmatprep.mubr.f32.mxu0 0.0
  %530 = vmatmul.mubr.f32.gmra.mrb[0].mxu0 %v60
  %v531 = vpop.f32.mrb[0].mxu0
  %v532 = vadd.f32 0.0, %v531
  %v533 = vpop.f32.mrb[0].mxu0
  %534 = vmatprep.mubr.f32.mxu0 0.0
  %535 = vmatmul.mubr.f32.gmra.mrb[0].mxu0 %v63
  %v536 = vpop.f32.mrb[0].mxu0
  %v537 = vadd.f32 0.0, %v536
  %v538 = vpop.f32.mrb[0].mxu0
  %539 = vmatprep.mubr.f32.mxu0 0.0
  %540 = vmatmul.mubr.f32.gmra.mrb[0].mxu0 %v66
  %v541 = vpop.f32.mrb[0].mxu0
  %v542 = vadd.f32 0.0, %v541
  %v543 = vpop.f32.mrb[0].mxu0
  %544 = vmatprep.mubr.f32.mxu0 0.0
  %545 = vmatmul.mubr.f32.gmra.mrb[0].mxu0 %v69
  %v546 = vpop.f32.mrb[0].mxu0
  %v547 = vadd.f32 0.0, %v546
  %v548 = vpop.f32.mrb[0].mxu0
  %549 = vmatprep.mubr.f32.mxu0 0.0
  %550 = vmatmul.mubr.f32.gmra.mrb[0].mxu0 %v72
  %v551 = vpop.f32.mrb[0].mxu0
  %v552 = vadd.f32 0.0, %v551
  %v553 = vpop.f32.mrb[0].mxu0
  %554 = vmatprep.mubr.f32.mxu0 0.0
  %555 = vmatmul.mubr.f32.gmra.mrb[0].mxu0 %v75
  %v556 = vpop.f32.mrb[0].mxu0
  %v557 = vadd.f32 0.0, %v556
  %v558 = vpop.f32.mrb[0].mxu0
  %559 = vmatprep.mubr.f32.mxu0 0.0
  %560 = vmatmul.mubr.f32.gmra.mrb[0].mxu0 %v78
  %v561 = vpop.f32.mrb[0].mxu0
  %v562 = vadd.f32 0.0, %v561
  %v563 = vpop.f32.mrb[0].mxu0
  %564 = vmatprep.mubr.f32.mxu0 0.0
  %565 = vmatmul.mubr.f32.gmra.mrb[0].mxu0 %v81
  %v566 = vpop.f32.mrb[0].mxu0
  %v567 = vadd.f32 0.0, %v566
  %v568 = vpop.f32.mrb[0].mxu0
  %569 = vmatprep.mubr.f32.mxu0 0.0
  %570 = vmatmul.mubr.f32.gmra.mrb[0].mxu0 %v84
  %v571 = vpop.f32.mrb[0].mxu0
  %v572 = vadd.f32 0.0, %v571
  %v573 = vpop.f32.mrb[0].mxu0
  %574 = vmatprep.mubr.f32.mxu0 0.0
  %575 = vmatmul.mubr.f32.gmra.mrb[0].mxu0 %v87
  %v576 = vpop.f32.mrb[0].mxu0
  %v577 = vadd.f32 0.0, %v576
  %v578 = vpop.f32.mrb[0].mxu0
  %579 = vmatprep.mubr.f32.mxu0 0.0
  %580 = vmatmul.mubr.f32.gmra.mrb[0].mxu0 %v90
  %v581 = vpop.f32.mrb[0].mxu0
  %v582 = vadd.f32 0.0, %v581
  %v583 = vpop.f32.mrb[0].mxu0
  %584 = vdwg.mxu0
  %585 = vst.msk [vmem:[#allocation2 + $0x100] sm:$0xff] %vm43, %v507
  %586 = vst.msk [vmem:[#allocation2 + $0x108] sm:$0xff] %vm43, %v512
  %587 = vst.msk [vmem:[#allocation2 + $0x110] sm:$0xff] %vm43, %v517
  %588 = vst.msk [vmem:[#allocation2 + $0x118] sm:$0xff] %vm43, %v522
  %589 = vst.msk [vmem:[#allocation2 + $0x120] sm:$0xff] %vm43, %v527
  %590 = vst.msk [vmem:[#allocation2 + $0x128] sm:$0xff] %vm43, %v532
  %591 = vst.msk [vmem:[#allocation2 + $0x130] sm:$0xff] %vm43, %v537
  %592 = vst.msk [vmem:[#allocation2 + $0x138] sm:$0xff] %vm43, %v542
  %593 = vst.msk [vmem:[#allocation2 + $0x140] sm:$0xff] %vm43, %v547
  %594 = vst.msk [vmem:[#allocation2 + $0x148] sm:$0xff] %vm43, %v552
  %595 = vst.msk [vmem:[#allocation2 + $0x150] sm:$0xff] %vm43, %v557
  %596 = vst.msk [vmem:[#allocation2 + $0x158] sm:$0xff] %vm43, %v562
  %597 = vst.msk [vmem:[#allocation2 + $0x160] sm:$0xff] %vm43, %v567
  %598 = vst.msk [vmem:[#allocation2 + $0x168] sm:$0xff] %vm43, %v572
  %599 = vst.msk [vmem:[#allocation2 + $0x170] sm:$0xff] %vm43, %v577
  %600 = vst.msk [vmem:[#allocation2 + $0x178] sm:$0xff] %vm43, %v582
  %s601 = scalar_lea.vmem %s0, 168
  %v602 = vld [vmem:[%s601] sm:$0xff]
  %v603 = vld [vmem:[%s601 + $0x8] sm:$0xff]
  %v604 = vld [vmem:[%s601 + $0x10] sm:$0xff]
  %v605 = vld [vmem:[%s601 + $0x18] sm:$0xff]
  %v606 = vld [vmem:[%s601 + $0x20] sm:$0xff]
  %v607 = vld [vmem:[%s601 + $0x28] sm:$0xff]
  %v608 = vld [vmem:[%s601 + $0x30] sm:$0x1]
  %v610 = vsel %vm92, %v608, 0
  %612 = vmatprep.subr.mxu0 0.0
  %613 = vmatpush1.msra.mxu0 %v602
  %614 = vmatprep.subr.mxu0 0.0
  %615 = vmatpush1.msra.mxu0 %v603
  %616 = vmatprep.subr.mxu0 0.0
  %617 = vmatpush1.msra.mxu0 %v604
  %618 = vmatprep.subr.mxu0 0.0
  %619 = vmatpush1.msra.mxu0 %v605
  %620 = vmatprep.subr.mxu0 0.0
  %621 = vmatpush1.msra.mxu0 %v606
  %622 = vmatprep.subr.mxu0 0.0
  %623 = vmatpush1.msra.mxu0 %v607
  %624 = vmatprep.subr.mxu0 0.0
  %625 = vmatpush1.msra.mxu0 %v610
  %626 = vmatprep.subr.mxu0 0.0
  %627 = vmatpush1.msra.mxu0 0.0
  %628 = vmatprep.subr.mxu0 0.0
  %629 = vmatpush1.msra.mxu0 0.0
  %630 = vmatprep.subr.mxu0 0.0
  %631 = vmatpush1.msra.mxu0 0.0
  %632 = vmatprep.subr.mxu0 0.0
  %633 = vmatpush1.msra.mxu0 0.0
  %634 = vmatprep.subr.mxu0 0.0
  %635 = vmatpush1.msra.mxu0 0.0
  %636 = vmatprep.subr.mxu0 0.0
  %637 = vmatpush1.msra.mxu0 0.0
  %638 = vmatprep.subr.mxu0 0.0
  %639 = vmatpush1.msra.mxu0 0.0
  %640 = vmatprep.subr.mxu0 0.0
  %641 = vmatpush1.msra.mxu0 0.0
  %642 = vmatprep.subr.mxu0 0.0
  %643 = vmatpush1.msra.mxu0 0.0
  %644 = vmatprep.subr.mxu0 0.0
  %645 = vmatpush1.msra.mxu0 0.0
  %646 = vmatprep.subr.mxu0 0.0
  %647 = vmatpush1.msra.mxu0 0.0
  %648 = vmatprep.subr.mxu0 0.0
  %649 = vmatpush1.msra.mxu0 0.0
  %650 = vmatprep.subr.mxu0 0.0
  %651 = vmatpush1.msra.mxu0 0.0
  %652 = vmatprep.subr.mxu0 0.0
  %653 = vmatpush1.msra.mxu0 0.0
  %654 = vmatprep.subr.mxu0 0.0
  %655 = vmatpush1.msra.mxu0 0.0
  %656 = vmatprep.subr.mxu0 0.0
  %657 = vmatpush1.msra.mxu0 0.0
  %658 = vmatprep.subr.mxu0 0.0
  %659 = vmatpush1.msra.mxu0 0.0
  %660 = vmatprep.subr.mxu0 0.0
  %661 = vmatpush1.msra.mxu0 0.0
  %662 = vmatprep.subr.mxu0 0.0
  %663 = vmatpush1.msra.mxu0 0.0
  %664 = vmatprep.subr.mxu0 0.0
  %665 = vmatpush1.msra.mxu0 0.0
  %666 = vmatprep.subr.mxu0 0.0
  %667 = vmatpush1.msra.mxu0 0.0
  %668 = vmatprep.subr.mxu0 0.0
  %669 = vmatpush1.msra.mxu0 0.0
  %670 = vmatprep.subr.mxu0 0.0
  %671 = vmatpush1.msra.mxu0 0.0
  %672 = vmatprep.subr.mxu0 0.0
  %673 = vmatpush1.msra.mxu0 0.0
  %674 = vmatprep.subr.mxu0 0.0
  %675 = vmatpush1.msra.mxu0 0.0
  %676 = vmatprep.mubr.f32.mxu0 0.0
  %677 = vmatmul.mubr.f32.gmra.mrb[0].mxu0 %v45
  %v678 = vpop.f32.mrb[0].mxu0
  %v679 = vadd.f32 0.0, %v678
  %v680 = vpop.f32.mrb[0].mxu0
  %681 = vmatprep.mubr.f32.mxu0 0.0
  %682 = vmatmul.mubr.f32.gmra.mrb[0].mxu0 %v48
  %v683 = vpop.f32.mrb[0].mxu0
  %v684 = vadd.f32 0.0, %v683
  %v685 = vpop.f32.mrb[0].mxu0
  %686 = vmatprep.mubr.f32.mxu0 0.0
  %687 = vmatmul.mubr.f32.gmra.mrb[0].mxu0 %v51
  %v688 = vpop.f32.mrb[0].mxu0
  %v689 = vadd.f32 0.0, %v688
  %v690 = vpop.f32.mrb[0].mxu0
  %691 = vmatprep.mubr.f32.mxu0 0.0
  %692 = vmatmul.mubr.f32.gmra.mrb[0].mxu0 %v54
  %v693 = vpop.f32.mrb[0].mxu0
  %v694 = vadd.f32 0.0, %v693
  %v695 = vpop.f32.mrb[0].mxu0
  %696 = vmatprep.mubr.f32.mxu0 0.0
  %697 = vmatmul.mubr.f32.gmra.mrb[0].mxu0 %v57
  %v698 = vpop.f32.mrb[0].mxu0
  %v699 = vadd.f32 0.0, %v698
  %v700 = vpop.f32.mrb[0].mxu0
  %701 = vmatprep.mubr.f32.mxu0 0.0
  %702 = vmatmul.mubr.f32.gmra.mrb[0].mxu0 %v60
  %v703 = vpop.f32.mrb[0].mxu0
  %v704 = vadd.f32 0.0, %v703
  %v705 = vpop.f32.mrb[0].mxu0
  %706 = vmatprep.mubr.f32.mxu0 0.0
  %707 = vmatmul.mubr.f32.gmra.mrb[0].mxu0 %v63
  %v708 = vpop.f32.mrb[0].mxu0
  %v709 = vadd.f32 0.0, %v708
  %v710 = vpop.f32.mrb[0].mxu0
  %711 = vmatprep.mubr.f32.mxu0 0.0
  %712 = vmatmul.mubr.f32.gmra.mrb[0].mxu0 %v66
  %v713 = vpop.f32.mrb[0].mxu0
  %v714 = vadd.f32 0.0, %v713
  %v715 = vpop.f32.mrb[0].mxu0
  %716 = vmatprep.mubr.f32.mxu0 0.0
  %717 = vmatmul.mubr.f32.gmra.mrb[0].mxu0 %v69
  %v718 = vpop.f32.mrb[0].mxu0
  %v719 = vadd.f32 0.0, %v718
  %v720 = vpop.f32.mrb[0].mxu0
  %721 = vmatprep.mubr.f32.mxu0 0.0
  %722 = vmatmul.mubr.f32.gmra.mrb[0].mxu0 %v72
  %v723 = vpop.f32.mrb[0].mxu0
  %v724 = vadd.f32 0.0, %v723
  %v725 = vpop.f32.mrb[0].mxu0
  %726 = vmatprep.mubr.f32.mxu0 0.0
  %727 = vmatmul.mubr.f32.gmra.mrb[0].mxu0 %v75
  %v728 = vpop.f32.mrb[0].mxu0
  %v729 = vadd.f32 0.0, %v728
  %v730 = vpop.f32.mrb[0].mxu0
  %731 = vmatprep.mubr.f32.mxu0 0.0
  %732 = vmatmul.mubr.f32.gmra.mrb[0].mxu0 %v78
  %v733 = vpop.f32.mrb[0].mxu0
  %v734 = vadd.f32 0.0, %v733
  %v735 = vpop.f32.mrb[0].mxu0
  %736 = vmatprep.mubr.f32.mxu0 0.0
  %737 = vmatmul.mubr.f32.gmra.mrb[0].mxu0 %v81
  %v738 = vpop.f32.mrb[0].mxu0
  %v739 = vadd.f32 0.0, %v738
  %v740 = vpop.f32.mrb[0].mxu0
  %741 = vmatprep.mubr.f32.mxu0 0.0
  %742 = vmatmul.mubr.f32.gmra.mrb[0].mxu0 %v84
  %v743 = vpop.f32.mrb[0].mxu0
  %v744 = vadd.f32 0.0, %v743
  %v745 = vpop.f32.mrb[0].mxu0
  %746 = vmatprep.mubr.f32.mxu0 0.0
  %747 = vmatmul.mubr.f32.gmra.mrb[0].mxu0 %v87
  %v748 = vpop.f32.mrb[0].mxu0
  %v749 = vadd.f32 0.0, %v748
  %v750 = vpop.f32.mrb[0].mxu0
  %751 = vmatprep.mubr.f32.mxu0 0.0
  %752 = vmatmul.mubr.f32.gmra.mrb[0].mxu0 %v90
  %v753 = vpop.f32.mrb[0].mxu0
  %v754 = vadd.f32 0.0, %v753
  %v755 = vpop.f32.mrb[0].mxu0
  %756 = vdwg.mxu0
  %757 = vst.msk [vmem:[#allocation2 + $0x180] sm:$0xff] %vm43, %v679
  %758 = vst.msk [vmem:[#allocation2 + $0x188] sm:$0xff] %vm43, %v684
  %759 = vst.msk [vmem:[#allocation2 + $0x190] sm:$0xff] %vm43, %v689
  %760 = vst.msk [vmem:[#allocation2 + $0x198] sm:$0xff] %vm43, %v694
  %761 = vst.msk [vmem:[#allocation2 + $0x1a0] sm:$0xff] %vm43, %v699
  %762 = vst.msk [vmem:[#allocation2 + $0x1a8] sm:$0xff] %vm43, %v704
  %763 = vst.msk [vmem:[#allocation2 + $0x1b0] sm:$0xff] %vm43, %v709
  %764 = vst.msk [vmem:[#allocation2 + $0x1b8] sm:$0xff] %vm43, %v714
  %765 = vst.msk [vmem:[#allocation2 + $0x1c0] sm:$0xff] %vm43, %v719
  %766 = vst.msk [vmem:[#allocation2 + $0x1c8] sm:$0xff] %vm43, %v724
  %767 = vst.msk [vmem:[#allocation2 + $0x1d0] sm:$0xff] %vm43, %v729
  %768 = vst.msk [vmem:[#allocation2 + $0x1d8] sm:$0xff] %vm43, %v734
  %769 = vst.msk [vmem:[#allocation2 + $0x1e0] sm:$0xff] %vm43, %v739
  %770 = vst.msk [vmem:[#allocation2 + $0x1e8] sm:$0xff] %vm43, %v744
  %771 = vst.msk [vmem:[#allocation2 + $0x1f0] sm:$0xff] %vm43, %v749
  %772 = vst.msk [vmem:[#allocation2 + $0x1f8] sm:$0xff] %vm43, %v754
  %s773 = scalar_lea.vmem %s0, 224
  %v774 = vld [vmem:[%s773] sm:$0xff]
  %v775 = vld [vmem:[%s773 + $0x8] sm:$0xff]
  %v776 = vld [vmem:[%s773 + $0x10] sm:$0xff]
  %v777 = vld [vmem:[%s773 + $0x18] sm:$0xff]
  %v778 = vld [vmem:[%s773 + $0x20] sm:$0xff]
  %v779 = vld [vmem:[%s773 + $0x28] sm:$0xff]
  %v780 = vld [vmem:[%s773 + $0x30] sm:$0x1]
  %v782 = vsel %vm92, %v780, 0
  %784 = vmatprep.subr.mxu0 0.0
  %785 = vmatpush1.msra.mxu0 %v774
  %786 = vmatprep.subr.mxu0 0.0
  %787 = vmatpush1.msra.mxu0 %v775
  %788 = vmatprep.subr.mxu0 0.0
  %789 = vmatpush1.msra.mxu0 %v776
  %790 = vmatprep.subr.mxu0 0.0
  %791 = vmatpush1.msra.mxu0 %v777
  %792 = vmatprep.subr.mxu0 0.0
  %793 = vmatpush1.msra.mxu0 %v778
  %794 = vmatprep.subr.mxu0 0.0
  %795 = vmatpush1.msra.mxu0 %v779
  %796 = vmatprep.subr.mxu0 0.0
  %797 = vmatpush1.msra.mxu0 %v782
  %798 = vmatprep.subr.mxu0 0.0
  %799 = vmatpush1.msra.mxu0 0.0
  %800 = vmatprep.subr.mxu0 0.0
  %801 = vmatpush1.msra.mxu0 0.0
  %802 = vmatprep.subr.mxu0 0.0
  %803 = vmatpush1.msra.mxu0 0.0
  %804 = vmatprep.subr.mxu0 0.0
  %805 = vmatpush1.msra.mxu0 0.0
  %806 = vmatprep.subr.mxu0 0.0
  %807 = vmatpush1.msra.mxu0 0.0
  %808 = vmatprep.subr.mxu0 0.0
  %809 = vmatpush1.msra.mxu0 0.0
  %810 = vmatprep.subr.mxu0 0.0
  %811 = vmatpush1.msra.mxu0 0.0
  %812 = vmatprep.subr.mxu0 0.0
  %813 = vmatpush1.msra.mxu0 0.0
  %814 = vmatprep.subr.mxu0 0.0
  %815 = vmatpush1.msra.mxu0 0.0
  %816 = vmatprep.subr.mxu0 0.0
  %817 = vmatpush1.msra.mxu0 0.0
  %818 = vmatprep.subr.mxu0 0.0
  %819 = vmatpush1.msra.mxu0 0.0
  %820 = vmatprep.subr.mxu0 0.0
  %821 = vmatpush1.msra.mxu0 0.0
  %822 = vmatprep.subr.mxu0 0.0
  %823 = vmatpush1.msra.mxu0 0.0
  %824 = vmatprep.subr.mxu0 0.0
  %825 = vmatpush1.msra.mxu0 0.0
  %826 = vmatprep.subr.mxu0 0.0
  %827 = vmatpush1.msra.mxu0 0.0
  %828 = vmatprep.subr.mxu0 0.0
  %829 = vmatpush1.msra.mxu0 0.0
  %830 = vmatprep.subr.mxu0 0.0
  %831 = vmatpush1.msra.mxu0 0.0
  %832 = vmatprep.subr.mxu0 0.0
  %833 = vmatpush1.msra.mxu0 0.0
  %834 = vmatprep.subr.mxu0 0.0
  %835 = vmatpush1.msra.mxu0 0.0
  %836 = vmatprep.subr.mxu0 0.0
  %837 = vmatpush1.msra.mxu0 0.0
  %838 = vmatprep.subr.mxu0 0.0
  %839 = vmatpush1.msra.mxu0 0.0
  %840 = vmatprep.subr.mxu0 0.0
  %841 = vmatpush1.msra.mxu0 0.0
  %842 = vmatprep.subr.mxu0 0.0
  %843 = vmatpush1.msra.mxu0 0.0
  %844 = vmatprep.subr.mxu0 0.0
  %845 = vmatpush1.msra.mxu0 0.0
  %846 = vmatprep.subr.mxu0 0.0
  %847 = vmatpush1.msra.mxu0 0.0
  %848 = vmatprep.mubr.f32.mxu0 0.0
  %849 = vmatmul.mubr.f32.gmra.mrb[0].mxu0 %v45
  %v850 = vpop.f32.mrb[0].mxu0
  %v851 = vadd.f32 0.0, %v850
  %v852 = vpop.f32.mrb[0].mxu0
  %853 = vmatprep.mubr.f32.mxu0 0.0
  %854 = vmatmul.mubr.f32.gmra.mrb[0].mxu0 %v48
  %v855 = vpop.f32.mrb[0].mxu0
  %v856 = vadd.f32 0.0, %v855
  %v857 = vpop.f32.mrb[0].mxu0
  %858 = vmatprep.mubr.f32.mxu0 0.0
  %859 = vmatmul.mubr.f32.gmra.mrb[0].mxu0 %v51
  %v860 = vpop.f32.mrb[0].mxu0
  %v861 = vadd.f32 0.0, %v860
  %v862 = vpop.f32.mrb[0].mxu0
  %863 = vmatprep.mubr.f32.mxu0 0.0
  %864 = vmatmul.mubr.f32.gmra.mrb[0].mxu0 %v54
  %v865 = vpop.f32.mrb[0].mxu0
  %v866 = vadd.f32 0.0, %v865
  %v867 = vpop.f32.mrb[0].mxu0
  %868 = vmatprep.mubr.f32.mxu0 0.0
  %869 = vmatmul.mubr.f32.gmra.mrb[0].mxu0 %v57
  %v870 = vpop.f32.mrb[0].mxu0
  %v871 = vadd.f32 0.0, %v870
  %v872 = vpop.f32.mrb[0].mxu0
  %873 = vmatprep.mubr.f32.mxu0 0.0
  %874 = vmatmul.mubr.f32.gmra.mrb[0].mxu0 %v60
  %v875 = vpop.f32.mrb[0].mxu0
  %v876 = vadd.f32 0.0, %v875
  %v877 = vpop.f32.mrb[0].mxu0
  %878 = vmatprep.mubr.f32.mxu0 0.0
  %879 = vmatmul.mubr.f32.gmra.mrb[0].mxu0 %v63
  %v880 = vpop.f32.mrb[0].mxu0
  %v881 = vadd.f32 0.0, %v880
  %v882 = vpop.f32.mrb[0].mxu0
  %883 = vmatprep.mubr.f32.mxu0 0.0
  %884 = vmatmul.mubr.f32.gmra.mrb[0].mxu0 %v66
  %v885 = vpop.f32.mrb[0].mxu0
  %v886 = vadd.f32 0.0, %v885
  %v887 = vpop.f32.mrb[0].mxu0
  %888 = vmatprep.mubr.f32.mxu0 0.0
  %889 = vmatmul.mubr.f32.gmra.mrb[0].mxu0 %v69
  %v890 = vpop.f32.mrb[0].mxu0
  %v891 = vadd.f32 0.0, %v890
  %v892 = vpop.f32.mrb[0].mxu0
  %893 = vmatprep.mubr.f32.mxu0 0.0
  %894 = vmatmul.mubr.f32.gmra.mrb[0].mxu0 %v72
  %v895 = vpop.f32.mrb[0].mxu0
  %v896 = vadd.f32 0.0, %v895
  %v897 = vpop.f32.mrb[0].mxu0
  %898 = vmatprep.mubr.f32.mxu0 0.0
  %899 = vmatmul.mubr.f32.gmra.mrb[0].mxu0 %v75
  %v900 = vpop.f32.mrb[0].mxu0
  %v901 = vadd.f32 0.0, %v900
  %v902 = vpop.f32.mrb[0].mxu0
  %903 = vmatprep.mubr.f32.mxu0 0.0
  %904 = vmatmul.mubr.f32.gmra.mrb[0].mxu0 %v78
  %v905 = vpop.f32.mrb[0].mxu0
  %v906 = vadd.f32 0.0, %v905
  %v907 = vpop.f32.mrb[0].mxu0
  %908 = vmatprep.mubr.f32.mxu0 0.0
  %909 = vmatmul.mubr.f32.gmra.mrb[0].mxu0 %v81
  %v910 = vpop.f32.mrb[0].mxu0
  %v911 = vadd.f32 0.0, %v910
  %v912 = vpop.f32.mrb[0].mxu0
  %913 = vmatprep.mubr.f32.mxu0 0.0
  %914 = vmatmul.mubr.f32.gmra.mrb[0].mxu0 %v84
  %v915 = vpop.f32.mrb[0].mxu0
  %v916 = vadd.f32 0.0, %v915
  %v917 = vpop.f32.mrb[0].mxu0
  %918 = vmatprep.mubr.f32.mxu0 0.0
  %919 = vmatmul.mubr.f32.gmra.mrb[0].mxu0 %v87
  %v920 = vpop.f32.mrb[0].mxu0
  %v921 = vadd.f32 0.0, %v920
  %v922 = vpop.f32.mrb[0].mxu0
  %923 = vmatprep.mubr.f32.mxu0 0.0
  %924 = vmatmul.mubr.f32.gmra.mrb[0].mxu0 %v90
  %v925 = vpop.f32.mrb[0].mxu0
  %v926 = vadd.f32 0.0, %v925
  %v927 = vpop.f32.mrb[0].mxu0
  %928 = vdwg.mxu0
  %929 = vst.msk [vmem:[#allocation2 + $0x200] sm:$0xff] %vm43, %v851
  %930 = vst.msk [vmem:[#allocation2 + $0x208] sm:$0xff] %vm43, %v856
  %931 = vst.msk [vmem:[#allocation2 + $0x210] sm:$0xff] %vm43, %v861
  %932 = vst.msk [vmem:[#allocation2 + $0x218] sm:$0xff] %vm43, %v866
  %933 = vst.msk [vmem:[#allocation2 + $0x220] sm:$0xff] %vm43, %v871
  %934 = vst.msk [vmem:[#allocation2 + $0x228] sm:$0xff] %vm43, %v876
  %935 = vst.msk [vmem:[#allocation2 + $0x230] sm:$0xff] %vm43, %v881
  %936 = vst.msk [vmem:[#allocation2 + $0x238] sm:$0xff] %vm43, %v886
  %937 = vst.msk [vmem:[#allocation2 + $0x240] sm:$0xff] %vm43, %v891
  %938 = vst.msk [vmem:[#allocation2 + $0x248] sm:$0xff] %vm43, %v896
  %939 = vst.msk [vmem:[#allocation2 + $0x250] sm:$0xff] %vm43, %v901
  %940 = vst.msk [vmem:[#allocation2 + $0x258] sm:$0xff] %vm43, %v906
  %941 = vst.msk [vmem:[#allocation2 + $0x260] sm:$0xff] %vm43, %v911
  %942 = vst.msk [vmem:[#allocation2 + $0x268] sm:$0xff] %vm43, %v916
  %943 = vst.msk [vmem:[#allocation2 + $0x270] sm:$0xff] %vm43, %v921
  %944 = vst.msk [vmem:[#allocation2 + $0x278] sm:$0xff] %vm43, %v926
  %s945 = scalar_lea.vmem %s0, 280
  %v946 = vld [vmem:[%s945] sm:$0xff]
  %v947 = vld [vmem:[%s945 + $0x8] sm:$0xff]
  %v948 = vld [vmem:[%s945 + $0x10] sm:$0xff]
  %v949 = vld [vmem:[%s945 + $0x18] sm:$0xff]
  %v950 = vld [vmem:[%s945 + $0x20] sm:$0xff]
  %v951 = vld [vmem:[%s945 + $0x28] sm:$0xff]
  %v952 = vld [vmem:[%s945 + $0x30] sm:$0x1]
  %v954 = vsel %vm92, %v952, 0
  %956 = vmatprep.subr.mxu0 0.0
  %957 = vmatpush1.msra.mxu0 %v946
  %958 = vmatprep.subr.mxu0 0.0
  %959 = vmatpush1.msra.mxu0 %v947
  %960 = vmatprep.subr.mxu0 0.0
  %961 = vmatpush1.msra.mxu0 %v948
  %962 = vmatprep.subr.mxu0 0.0
  %963 = vmatpush1.msra.mxu0 %v949
  %964 = vmatprep.subr.mxu0 0.0
  %965 = vmatpush1.msra.mxu0 %v950
  %966 = vmatprep.subr.mxu0 0.0
  %967 = vmatpush1.msra.mxu0 %v951
  %968 = vmatprep.subr.mxu0 0.0
  %969 = vmatpush1.msra.mxu0 %v954
  %970 = vmatprep.subr.mxu0 0.0
  %971 = vmatpush1.msra.mxu0 0.0
  %972 = vmatprep.subr.mxu0 0.0
  %973 = vmatpush1.msra.mxu0 0.0
  %974 = vmatprep.subr.mxu0 0.0
  %975 = vmatpush1.msra.mxu0 0.0
  %976 = vmatprep.subr.mxu0 0.0
  %977 = vmatpush1.msra.mxu0 0.0
  %978 = vmatprep.subr.mxu0 0.0
  %979 = vmatpush1.msra.mxu0 0.0
  %980 = vmatprep.subr.mxu0 0.0
  %981 = vmatpush1.msra.mxu0 0.0
  %982 = vmatprep.subr.mxu0 0.0
  %983 = vmatpush1.msra.mxu0 0.0
  %984 = vmatprep.subr.mxu0 0.0
  %985 = vmatpush1.msra.mxu0 0.0
  %986 = vmatprep.subr.mxu0 0.0
  %987 = vmatpush1.msra.mxu0 0.0
  %988 = vmatprep.subr.mxu0 0.0
  %989 = vmatpush1.msra.mxu0 0.0
  %990 = vmatprep.subr.mxu0 0.0
  %991 = vmatpush1.msra.mxu0 0.0
  %992 = vmatprep.subr.mxu0 0.0
  %993 = vmatpush1.msra.mxu0 0.0
  %994 = vmatprep.subr.mxu0 0.0
  %995 = vmatpush1.msra.mxu0 0.0
  %996 = vmatprep.subr.mxu0 0.0
  %997 = vmatpush1.msra.mxu0 0.0
  %998 = vmatprep.subr.mxu0 0.0
  %999 = vmatpush1.msra.mxu0 0.0
  %1000 = vmatprep.subr.mxu0 0.0
  %1001 = vmatpush1.msra.mxu0 0.0
  %1002 = vmatprep.subr.mxu0 0.0
  %1003 = vmatpush1.msra.mxu0 0.0
  %1004 = vmatprep.subr.mxu0 0.0
  %1005 = vmatpush1.msra.mxu0 0.0
  %1006 = vmatprep.subr.mxu0 0.0
  %1007 = vmatpush1.msra.mxu0 0.0
  %1008 = vmatprep.subr.mxu0 0.0
  %1009 = vmatpush1.msra.mxu0 0.0
  %1010 = vmatprep.subr.mxu0 0.0
  %1011 = vmatpush1.msra.mxu0 0.0
  %1012 = vmatprep.subr.mxu0 0.0
  %1013 = vmatpush1.msra.mxu0 0.0
  %1014 = vmatprep.subr.mxu0 0.0
  %1015 = vmatpush1.msra.mxu0 0.0
  %1016 = vmatprep.subr.mxu0 0.0
  %1017 = vmatpush1.msra.mxu0 0.0
  %1018 = vmatprep.subr.mxu0 0.0
  %1019 = vmatpush1.msra.mxu0 0.0
  %1020 = vmatprep.mubr.f32.mxu0 0.0
  %1021 = vmatmul.mubr.f32.gmra.mrb[0].mxu0 %v45
  %v1022 = vpop.f32.mrb[0].mxu0
  %v1023 = vadd.f32 0.0, %v1022
  %v1024 = vpop.f32.mrb[0].mxu0
  %1025 = vmatprep.mubr.f32.mxu0 0.0
  %1026 = vmatmul.mubr.f32.gmra.mrb[0].mxu0 %v48
  %v1027 = vpop.f32.mrb[0].mxu0
  %v1028 = vadd.f32 0.0, %v1027
  %v1029 = vpop.f32.mrb[0].mxu0
  %1030 = vmatprep.mubr.f32.mxu0 0.0
  %1031 = vmatmul.mubr.f32.gmra.mrb[0].mxu0 %v51
  %v1032 = vpop.f32.mrb[0].mxu0
  %v1033 = vadd.f32 0.0, %v1032
  %v1034 = vpop.f32.mrb[0].mxu0
  %1035 = vmatprep.mubr.f32.mxu0 0.0
  %1036 = vmatmul.mubr.f32.gmra.mrb[0].mxu0 %v54
  %v1037 = vpop.f32.mrb[0].mxu0
  %v1038 = vadd.f32 0.0, %v1037
  %v1039 = vpop.f32.mrb[0].mxu0
  %1040 = vmatprep.mubr.f32.mxu0 0.0
  %1041 = vmatmul.mubr.f32.gmra.mrb[0].mxu0 %v57
  %v1042 = vpop.f32.mrb[0].mxu0
  %v1043 = vadd.f32 0.0, %v1042
  %v1044 = vpop.f32.mrb[0].mxu0
  %1045 = vmatprep.mubr.f32.mxu0 0.0
  %1046 = vmatmul.mubr.f32.gmra.mrb[0].mxu0 %v60
  %v1047 = vpop.f32.mrb[0].mxu0
  %v1048 = vadd.f32 0.0, %v1047
  %v1049 = vpop.f32.mrb[0].mxu0
  %1050 = vmatprep.mubr.f32.mxu0 0.0
  %1051 = vmatmul.mubr.f32.gmra.mrb[0].mxu0 %v63
  %v1052 = vpop.f32.mrb[0].mxu0
  %v1053 = vadd.f32 0.0, %v1052
  %v1054 = vpop.f32.mrb[0].mxu0
  %1055 = vmatprep.mubr.f32.mxu0 0.0
  %1056 = vmatmul.mubr.f32.gmra.mrb[0].mxu0 %v66
  %v1057 = vpop.f32.mrb[0].mxu0
  %v1058 = vadd.f32 0.0, %v1057
  %v1059 = vpop.f32.mrb[0].mxu0
  %1060 = vmatprep.mubr.f32.mxu0 0.0
  %1061 = vmatmul.mubr.f32.gmra.mrb[0].mxu0 %v69
  %v1062 = vpop.f32.mrb[0].mxu0
  %v1063 = vadd.f32 0.0, %v1062
  %v1064 = vpop.f32.mrb[0].mxu0
  %1065 = vmatprep.mubr.f32.mxu0 0.0
  %1066 = vmatmul.mubr.f32.gmra.mrb[0].mxu0 %v72
  %v1067 = vpop.f32.mrb[0].mxu0
  %v1068 = vadd.f32 0.0, %v1067
  %v1069 = vpop.f32.mrb[0].mxu0
  %1070 = vmatprep.mubr.f32.mxu0 0.0
  %1071 = vmatmul.mubr.f32.gmra.mrb[0].mxu0 %v75
  %v1072 = vpop.f32.mrb[0].mxu0
  %v1073 = vadd.f32 0.0, %v1072
  %v1074 = vpop.f32.mrb[0].mxu0
  %1075 = vmatprep.mubr.f32.mxu0 0.0
  %1076 = vmatmul.mubr.f32.gmra.mrb[0].mxu0 %v78
  %v1077 = vpop.f32.mrb[0].mxu0
  %v1078 = vadd.f32 0.0, %v1077
  %v1079 = vpop.f32.mrb[0].mxu0
  %1080 = vmatprep.mubr.f32.mxu0 0.0
  %1081 = vmatmul.mubr.f32.gmra.mrb[0].mxu0 %v81
  %v1082 = vpop.f32.mrb[0].mxu0
  %v1083 = vadd.f32 0.0, %v1082
  %v1084 = vpop.f32.mrb[0].mxu0
  %1085 = vmatprep.mubr.f32.mxu0 0.0
  %1086 = vmatmul.mubr.f32.gmra.mrb[0].mxu0 %v84
  %v1087 = vpop.f32.mrb[0].mxu0
  %v1088 = vadd.f32 0.0, %v1087
  %v1089 = vpop.f32.mrb[0].mxu0
  %1090 = vmatprep.mubr.f32.mxu0 0.0
  %1091 = vmatmul.mubr.f32.gmra.mrb[0].mxu0 %v87
  %v1092 = vpop.f32.mrb[0].mxu0
  %v1093 = vadd.f32 0.0, %v1092
  %v1094 = vpop.f32.mrb[0].mxu0
  %1095 = vmatprep.mubr.f32.mxu0 0.0
  %1096 = vmatmul.mubr.f32.gmra.mrb[0].mxu0 %v90
  %v1097 = vpop.f32.mrb[0].mxu0
  %v1098 = vadd.f32 0.0, %v1097
  %v1099 = vpop.f32.mrb[0].mxu0
  %1100 = vdwg.mxu0
  %1101 = vst.msk [vmem:[#allocation2 + $0x280] sm:$0xff] %vm43, %v1023
  %1102 = vst.msk [vmem:[#allocation2 + $0x288] sm:$0xff] %vm43, %v1028
  %1103 = vst.msk [vmem:[#allocation2 + $0x290] sm:$0xff] %vm43, %v1033
  %1104 = vst.msk [vmem:[#allocation2 + $0x298] sm:$0xff] %vm43, %v1038
  %1105 = vst.msk [vmem:[#allocation2 + $0x2a0] sm:$0xff] %vm43, %v1043
  %1106 = vst.msk [vmem:[#allocation2 + $0x2a8] sm:$0xff] %vm43, %v1048
  %1107 = vst.msk [vmem:[#allocation2 + $0x2b0] sm:$0xff] %vm43, %v1053
  %1108 = vst.msk [vmem:[#allocation2 + $0x2b8] sm:$0xff] %vm43, %v1058
  %1109 = vst.msk [vmem:[#allocation2 + $0x2c0] sm:$0xff] %vm43, %v1063
  %1110 = vst.msk [vmem:[#allocation2 + $0x2c8] sm:$0xff] %vm43, %v1068
  %1111 = vst.msk [vmem:[#allocation2 + $0x2d0] sm:$0xff] %vm43, %v1073
  %1112 = vst.msk [vmem:[#allocation2 + $0x2d8] sm:$0xff] %vm43, %v1078
  %1113 = vst.msk [vmem:[#allocation2 + $0x2e0] sm:$0xff] %vm43, %v1083
  %1114 = vst.msk [vmem:[#allocation2 + $0x2e8] sm:$0xff] %vm43, %v1088
  %1115 = vst.msk [vmem:[#allocation2 + $0x2f0] sm:$0xff] %vm43, %v1093
  %1116 = vst.msk [vmem:[#allocation2 + $0x2f8] sm:$0xff] %vm43, %v1098
  %s1117 = scalar_lea.vmem %s0, 336
  %v1118 = vld [vmem:[%s1117] sm:$0xff]
  %v1119 = vld [vmem:[%s1117 + $0x8] sm:$0xff]
  %v1120 = vld [vmem:[%s1117 + $0x10] sm:$0xff]
  %v1121 = vld [vmem:[%s1117 + $0x18] sm:$0xff]
  %v1122 = vld [vmem:[%s1117 + $0x20] sm:$0xff]
  %v1123 = vld [vmem:[%s1117 + $0x28] sm:$0xff]
  %v1124 = vld [vmem:[%s1117 + $0x30] sm:$0x1]
  %v1126 = vsel %vm92, %v1124, 0
  %1128 = vmatprep.subr.mxu0 0.0
  %1129 = vmatpush1.msra.mxu0 %v1118
  %1130 = vmatprep.subr.mxu0 0.0
  %1131 = vmatpush1.msra.mxu0 %v1119
  %1132 = vmatprep.subr.mxu0 0.0
  %1133 = vmatpush1.msra.mxu0 %v1120
  %1134 = vmatprep.subr.mxu0 0.0
  %1135 = vmatpush1.msra.mxu0 %v1121
  %1136 = vmatprep.subr.mxu0 0.0
  %1137 = vmatpush1.msra.mxu0 %v1122
  %1138 = vmatprep.subr.mxu0 0.0
  %1139 = vmatpush1.msra.mxu0 %v1123
  %1140 = vmatprep.subr.mxu0 0.0
  %1141 = vmatpush1.msra.mxu0 %v1126
  %1142 = vmatprep.subr.mxu0 0.0
  %1143 = vmatpush1.msra.mxu0 0.0
  %1144 = vmatprep.subr.mxu0 0.0
  %1145 = vmatpush1.msra.mxu0 0.0
  %1146 = vmatprep.subr.mxu0 0.0
  %1147 = vmatpush1.msra.mxu0 0.0
  %1148 = vmatprep.subr.mxu0 0.0
  %1149 = vmatpush1.msra.mxu0 0.0
  %1150 = vmatprep.subr.mxu0 0.0
  %1151 = vmatpush1.msra.mxu0 0.0
  %1152 = vmatprep.subr.mxu0 0.0
  %1153 = vmatpush1.msra.mxu0 0.0
  %1154 = vmatprep.subr.mxu0 0.0
  %1155 = vmatpush1.msra.mxu0 0.0
  %1156 = vmatprep.subr.mxu0 0.0
  %1157 = vmatpush1.msra.mxu0 0.0
  %1158 = vmatprep.subr.mxu0 0.0
  %1159 = vmatpush1.msra.mxu0 0.0
  %1160 = vmatprep.subr.mxu0 0.0
  %1161 = vmatpush1.msra.mxu0 0.0
  %1162 = vmatprep.subr.mxu0 0.0
  %1163 = vmatpush1.msra.mxu0 0.0
  %1164 = vmatprep.subr.mxu0 0.0
  %1165 = vmatpush1.msra.mxu0 0.0
  %1166 = vmatprep.subr.mxu0 0.0
  %1167 = vmatpush1.msra.mxu0 0.0
  %1168 = vmatprep.subr.mxu0 0.0
  %1169 = vmatpush1.msra.mxu0 0.0
  %1170 = vmatprep.subr.mxu0 0.0
  %1171 = vmatpush1.msra.mxu0 0.0
  %1172 = vmatprep.subr.mxu0 0.0
  %1173 = vmatpush1.msra.mxu0 0.0
  %1174 = vmatprep.subr.mxu0 0.0
  %1175 = vmatpush1.msra.mxu0 0.0
  %1176 = vmatprep.subr.mxu0 0.0
  %1177 = vmatpush1.msra.mxu0 0.0
  %1178 = vmatprep.subr.mxu0 0.0
  %1179 = vmatpush1.msra.mxu0 0.0
  %1180 = vmatprep.subr.mxu0 0.0
  %1181 = vmatpush1.msra.mxu0 0.0
  %1182 = vmatprep.subr.mxu0 0.0
  %1183 = vmatpush1.msra.mxu0 0.0
  %1184 = vmatprep.subr.mxu0 0.0
  %1185 = vmatpush1.msra.mxu0 0.0
  %1186 = vmatprep.subr.mxu0 0.0
  %1187 = vmatpush1.msra.mxu0 0.0
  %1188 = vmatprep.subr.mxu0 0.0
  %1189 = vmatpush1.msra.mxu0 0.0
  %1190 = vmatprep.subr.mxu0 0.0
  %1191 = vmatpush1.msra.mxu0 0.0
  %1192 = vmatprep.mubr.f32.mxu0 0.0
  %1193 = vmatmul.mubr.f32.gmra.mrb[0].mxu0 %v45
  %v1194 = vpop.f32.mrb[0].mxu0
  %v1195 = vadd.f32 0.0, %v1194
  %v1196 = vpop.f32.mrb[0].mxu0
  %1197 = vmatprep.mubr.f32.mxu0 0.0
  %1198 = vmatmul.mubr.f32.gmra.mrb[0].mxu0 %v48
  %v1199 = vpop.f32.mrb[0].mxu0
  %v1200 = vadd.f32 0.0, %v1199
  %v1201 = vpop.f32.mrb[0].mxu0
  %1202 = vmatprep.mubr.f32.mxu0 0.0
  %1203 = vmatmul.mubr.f32.gmra.mrb[0].mxu0 %v51
  %v1204 = vpop.f32.mrb[0].mxu0
  %v1205 = vadd.f32 0.0, %v1204
  %v1206 = vpop.f32.mrb[0].mxu0
  %1207 = vmatprep.mubr.f32.mxu0 0.0
  %1208 = vmatmul.mubr.f32.gmra.mrb[0].mxu0 %v54
  %v1209 = vpop.f32.mrb[0].mxu0
  %v1210 = vadd.f32 0.0, %v1209
  %v1211 = vpop.f32.mrb[0].mxu0
  %1212 = vmatprep.mubr.f32.mxu0 0.0
  %1213 = vmatmul.mubr.f32.gmra.mrb[0].mxu0 %v57
  %v1214 = vpop.f32.mrb[0].mxu0
  %v1215 = vadd.f32 0.0, %v1214
  %v1216 = vpop.f32.mrb[0].mxu0
  %1217 = vmatprep.mubr.f32.mxu0 0.0
  %1218 = vmatmul.mubr.f32.gmra.mrb[0].mxu0 %v60
  %v1219 = vpop.f32.mrb[0].mxu0
  %v1220 = vadd.f32 0.0, %v1219
  %v1221 = vpop.f32.mrb[0].mxu0
  %1222 = vmatprep.mubr.f32.mxu0 0.0
  %1223 = vmatmul.mubr.f32.gmra.mrb[0].mxu0 %v63
  %v1224 = vpop.f32.mrb[0].mxu0
  %v1225 = vadd.f32 0.0, %v1224
  %v1226 = vpop.f32.mrb[0].mxu0
  %1227 = vmatprep.mubr.f32.mxu0 0.0
  %1228 = vmatmul.mubr.f32.gmra.mrb[0].mxu0 %v66
  %v1229 = vpop.f32.mrb[0].mxu0
  %v1230 = vadd.f32 0.0, %v1229
  %v1231 = vpop.f32.mrb[0].mxu0
  %1232 = vmatprep.mubr.f32.mxu0 0.0
  %1233 = vmatmul.mubr.f32.gmra.mrb[0].mxu0 %v69
  %v1234 = vpop.f32.mrb[0].mxu0
  %v1235 = vadd.f32 0.0, %v1234
  %v1236 = vpop.f32.mrb[0].mxu0
  %1237 = vmatprep.mubr.f32.mxu0 0.0
  %1238 = vmatmul.mubr.f32.gmra.mrb[0].mxu0 %v72
  %v1239 = vpop.f32.mrb[0].mxu0
  %v1240 = vadd.f32 0.0, %v1239
  %v1241 = vpop.f32.mrb[0].mxu0
  %1242 = vmatprep.mubr.f32.mxu0 0.0
  %1243 = vmatmul.mubr.f32.gmra.mrb[0].mxu0 %v75
  %v1244 = vpop.f32.mrb[0].mxu0
  %v1245 = vadd.f32 0.0, %v1244
  %v1246 = vpop.f32.mrb[0].mxu0
  %1247 = vmatprep.mubr.f32.mxu0 0.0
  %1248 = vmatmul.mubr.f32.gmra.mrb[0].mxu0 %v78
  %v1249 = vpop.f32.mrb[0].mxu0
  %v1250 = vadd.f32 0.0, %v1249
  %v1251 = vpop.f32.mrb[0].mxu0
  %1252 = vmatprep.mubr.f32.mxu0 0.0
  %1253 = vmatmul.mubr.f32.gmra.mrb[0].mxu0 %v81
  %v1254 = vpop.f32.mrb[0].mxu0
  %v1255 = vadd.f32 0.0, %v1254
  %v1256 = vpop.f32.mrb[0].mxu0
  %1257 = vmatprep.mubr.f32.mxu0 0.0
  %1258 = vmatmul.mubr.f32.gmra.mrb[0].mxu0 %v84
  %v1259 = vpop.f32.mrb[0].mxu0
  %v1260 = vadd.f32 0.0, %v1259
  %v1261 = vpop.f32.mrb[0].mxu0
  %1262 = vmatprep.mubr.f32.mxu0 0.0
  %1263 = vmatmul.mubr.f32.gmra.mrb[0].mxu0 %v87
  %v1264 = vpop.f32.mrb[0].mxu0
  %v1265 = vadd.f32 0.0, %v1264
  %v1266 = vpop.f32.mrb[0].mxu0
  %1267 = vmatprep.mubr.f32.mxu0 0.0
  %1268 = vmatmul.mubr.f32.gmra.mrb[0].mxu0 %v90
  %v1269 = vpop.f32.mrb[0].mxu0
  %v1270 = vadd.f32 0.0, %v1269
  %v1271 = vpop.f32.mrb[0].mxu0
  %1272 = vdwg.mxu0
  %1273 = vst.msk [vmem:[#allocation2 + $0x300] sm:$0xff] %vm43, %v1195
  %1274 = vst.msk [vmem:[#allocation2 + $0x308] sm:$0xff] %vm43, %v1200
  %1275 = vst.msk [vmem:[#allocation2 + $0x310] sm:$0xff] %vm43, %v1205
  %1276 = vst.msk [vmem:[#allocation2 + $0x318] sm:$0xff] %vm43, %v1210
  %1277 = vst.msk [vmem:[#allocation2 + $0x320] sm:$0xff] %vm43, %v1215
  %1278 = vst.msk [vmem:[#allocation2 + $0x328] sm:$0xff] %vm43, %v1220
  %1279 = vst.msk [vmem:[#allocation2 + $0x330] sm:$0xff] %vm43, %v1225
  %1280 = vst.msk [vmem:[#allocation2 + $0x338] sm:$0xff] %vm43, %v1230
  %1281 = vst.msk [vmem:[#allocation2 + $0x340] sm:$0xff] %vm43, %v1235
  %1282 = vst.msk [vmem:[#allocation2 + $0x348] sm:$0xff] %vm43, %v1240
  %1283 = vst.msk [vmem:[#allocation2 + $0x350] sm:$0xff] %vm43, %v1245
  %1284 = vst.msk [vmem:[#allocation2 + $0x358] sm:$0xff] %vm43, %v1250
  %1285 = vst.msk [vmem:[#allocation2 + $0x360] sm:$0xff] %vm43, %v1255
  %1286 = vst.msk [vmem:[#allocation2 + $0x368] sm:$0xff] %vm43, %v1260
  %1287 = vst.msk [vmem:[#allocation2 + $0x370] sm:$0xff] %vm43, %v1265
  %1288 = vst.msk [vmem:[#allocation2 + $0x378] sm:$0xff] %vm43, %v1270
  %s1289 = scalar_lea.vmem %s0, 392
  %v1290 = vld [vmem:[%s1289] sm:$0xff]
  %v1291 = vld [vmem:[%s1289 + $0x8] sm:$0xff]
  %v1292 = vld [vmem:[%s1289 + $0x10] sm:$0xff]
  %v1293 = vld [vmem:[%s1289 + $0x18] sm:$0xff]
  %v1294 = vld [vmem:[%s1289 + $0x20] sm:$0xff]
  %v1295 = vld [vmem:[%s1289 + $0x28] sm:$0xff]
  %v1296 = vld [vmem:[%s1289 + $0x30] sm:$0x1]
  %v1298 = vsel %vm92, %v1296, 0
  %1300 = vmatprep.subr.mxu0 0.0
  %1301 = vmatpush1.msra.mxu0 %v1290
  %1302 = vmatprep.subr.mxu0 0.0
  %1303 = vmatpush1.msra.mxu0 %v1291
  %1304 = vmatprep.subr.mxu0 0.0
  %1305 = vmatpush1.msra.mxu0 %v1292
  %1306 = vmatprep.subr.mxu0 0.0
  %1307 = vmatpush1.msra.mxu0 %v1293
  %1308 = vmatprep.subr.mxu0 0.0
  %1309 = vmatpush1.msra.mxu0 %v1294
  %1310 = vmatprep.subr.mxu0 0.0
  %1311 = vmatpush1.msra.mxu0 %v1295
  %1312 = vmatprep.subr.mxu0 0.0
  %1313 = vmatpush1.msra.mxu0 %v1298
  %1314 = vmatprep.subr.mxu0 0.0
  %1315 = vmatpush1.msra.mxu0 0.0
  %1316 = vmatprep.subr.mxu0 0.0
  %1317 = vmatpush1.msra.mxu0 0.0
  %1318 = vmatprep.subr.mxu0 0.0
  %1319 = vmatpush1.msra.mxu0 0.0
  %1320 = vmatprep.subr.mxu0 0.0
  %1321 = vmatpush1.msra.mxu0 0.0
  %1322 = vmatprep.subr.mxu0 0.0
  %1323 = vmatpush1.msra.mxu0 0.0
  %1324 = vmatprep.subr.mxu0 0.0
  %1325 = vmatpush1.msra.mxu0 0.0
  %1326 = vmatprep.subr.mxu0 0.0
  %1327 = vmatpush1.msra.mxu0 0.0
  %1328 = vmatprep.subr.mxu0 0.0
  %1329 = vmatpush1.msra.mxu0 0.0
  %1330 = vmatprep.subr.mxu0 0.0
  %1331 = vmatpush1.msra.mxu0 0.0
  %1332 = vmatprep.subr.mxu0 0.0
  %1333 = vmatpush1.msra.mxu0 0.0
  %1334 = vmatprep.subr.mxu0 0.0
  %1335 = vmatpush1.msra.mxu0 0.0
  %1336 = vmatprep.subr.mxu0 0.0
  %1337 = vmatpush1.msra.mxu0 0.0
  %1338 = vmatprep.subr.mxu0 0.0
  %1339 = vmatpush1.msra.mxu0 0.0
  %1340 = vmatprep.subr.mxu0 0.0
  %1341 = vmatpush1.msra.mxu0 0.0
  %1342 = vmatprep.subr.mxu0 0.0
  %1343 = vmatpush1.msra.mxu0 0.0
  %1344 = vmatprep.subr.mxu0 0.0
  %1345 = vmatpush1.msra.mxu0 0.0
  %1346 = vmatprep.subr.mxu0 0.0
  %1347 = vmatpush1.msra.mxu0 0.0
  %1348 = vmatprep.subr.mxu0 0.0
  %1349 = vmatpush1.msra.mxu0 0.0
  %1350 = vmatprep.subr.mxu0 0.0
  %1351 = vmatpush1.msra.mxu0 0.0
  %1352 = vmatprep.subr.mxu0 0.0
  %1353 = vmatpush1.msra.mxu0 0.0
  %1354 = vmatprep.subr.mxu0 0.0
  %1355 = vmatpush1.msra.mxu0 0.0
  %1356 = vmatprep.subr.mxu0 0.0
  %1357 = vmatpush1.msra.mxu0 0.0
  %1358 = vmatprep.subr.mxu0 0.0
  %1359 = vmatpush1.msra.mxu0 0.0
  %1360 = vmatprep.subr.mxu0 0.0
  %1361 = vmatpush1.msra.mxu0 0.0
  %1362 = vmatprep.subr.mxu0 0.0
  %1363 = vmatpush1.msra.mxu0 0.0
  %1364 = vmatprep.mubr.f32.mxu0 0.0
  %1365 = vmatmul.mubr.f32.gmra.mrb[0].mxu0 %v45
  %v1366 = vpop.f32.mrb[0].mxu0
  %v1367 = vadd.f32 0.0, %v1366
  %v1368 = vpop.f32.mrb[0].mxu0
  %1369 = vmatprep.mubr.f32.mxu0 0.0
  %1370 = vmatmul.mubr.f32.gmra.mrb[0].mxu0 %v48
  %v1371 = vpop.f32.mrb[0].mxu0
  %v1372 = vadd.f32 0.0, %v1371
  %v1373 = vpop.f32.mrb[0].mxu0
  %1374 = vmatprep.mubr.f32.mxu0 0.0
  %1375 = vmatmul.mubr.f32.gmra.mrb[0].mxu0 %v51
  %v1376 = vpop.f32.mrb[0].mxu0
  %v1377 = vadd.f32 0.0, %v1376
  %v1378 = vpop.f32.mrb[0].mxu0
  %1379 = vmatprep.mubr.f32.mxu0 0.0
  %1380 = vmatmul.mubr.f32.gmra.mrb[0].mxu0 %v54
  %v1381 = vpop.f32.mrb[0].mxu0
  %v1382 = vadd.f32 0.0, %v1381
  %v1383 = vpop.f32.mrb[0].mxu0
  %1384 = vmatprep.mubr.f32.mxu0 0.0
  %1385 = vmatmul.mubr.f32.gmra.mrb[0].mxu0 %v57
  %v1386 = vpop.f32.mrb[0].mxu0
  %v1387 = vadd.f32 0.0, %v1386
  %v1388 = vpop.f32.mrb[0].mxu0
  %1389 = vmatprep.mubr.f32.mxu0 0.0
  %1390 = vmatmul.mubr.f32.gmra.mrb[0].mxu0 %v60
  %v1391 = vpop.f32.mrb[0].mxu0
  %v1392 = vadd.f32 0.0, %v1391
  %v1393 = vpop.f32.mrb[0].mxu0
  %1394 = vmatprep.mubr.f32.mxu0 0.0
  %1395 = vmatmul.mubr.f32.gmra.mrb[0].mxu0 %v63
  %v1396 = vpop.f32.mrb[0].mxu0
  %v1397 = vadd.f32 0.0, %v1396
  %v1398 = vpop.f32.mrb[0].mxu0
  %1399 = vmatprep.mubr.f32.mxu0 0.0
  %1400 = vmatmul.mubr.f32.gmra.mrb[0].mxu0 %v66
  %v1401 = vpop.f32.mrb[0].mxu0
  %v1402 = vadd.f32 0.0, %v1401
  %v1403 = vpop.f32.mrb[0].mxu0
  %1404 = vmatprep.mubr.f32.mxu0 0.0
  %1405 = vmatmul.mubr.f32.gmra.mrb[0].mxu0 %v69
  %v1406 = vpop.f32.mrb[0].mxu0
  %v1407 = vadd.f32 0.0, %v1406
  %v1408 = vpop.f32.mrb[0].mxu0
  %1409 = vmatprep.mubr.f32.mxu0 0.0
  %1410 = vmatmul.mubr.f32.gmra.mrb[0].mxu0 %v72
  %v1411 = vpop.f32.mrb[0].mxu0
  %v1412 = vadd.f32 0.0, %v1411
  %v1413 = vpop.f32.mrb[0].mxu0
  %1414 = vmatprep.mubr.f32.mxu0 0.0
  %1415 = vmatmul.mubr.f32.gmra.mrb[0].mxu0 %v75
  %v1416 = vpop.f32.mrb[0].mxu0
  %v1417 = vadd.f32 0.0, %v1416
  %v1418 = vpop.f32.mrb[0].mxu0
  %1419 = vmatprep.mubr.f32.mxu0 0.0
  %1420 = vmatmul.mubr.f32.gmra.mrb[0].mxu0 %v78
  %v1421 = vpop.f32.mrb[0].mxu0
  %v1422 = vadd.f32 0.0, %v1421
  %v1423 = vpop.f32.mrb[0].mxu0
  %1424 = vmatprep.mubr.f32.mxu0 0.0
  %1425 = vmatmul.mubr.f32.gmra.mrb[0].mxu0 %v81
  %v1426 = vpop.f32.mrb[0].mxu0
  %v1427 = vadd.f32 0.0, %v1426
  %v1428 = vpop.f32.mrb[0].mxu0
  %1429 = vmatprep.mubr.f32.mxu0 0.0
  %1430 = vmatmul.mubr.f32.gmra.mrb[0].mxu0 %v84
  %v1431 = vpop.f32.mrb[0].mxu0
  %v1432 = vadd.f32 0.0, %v1431
  %v1433 = vpop.f32.mrb[0].mxu0
  %1434 = vmatprep.mubr.f32.mxu0 0.0
  %1435 = vmatmul.mubr.f32.gmra.mrb[0].mxu0 %v87
  %v1436 = vpop.f32.mrb[0].mxu0
  %v1437 = vadd.f32 0.0, %v1436
  %v1438 = vpop.f32.mrb[0].mxu0
  %1439 = vmatprep.mubr.f32.mxu0 0.0
  %1440 = vmatmul.mubr.f32.gmra.mrb[0].mxu0 %v90
  %v1441 = vpop.f32.mrb[0].mxu0
  %v1442 = vadd.f32 0.0, %v1441
  %v1443 = vpop.f32.mrb[0].mxu0
  %1444 = vdwg.mxu0
  %1445 = vst.msk [vmem:[#allocation2 + $0x380] sm:$0xff] %vm43, %v1367
  %1446 = vst.msk [vmem:[#allocation2 + $0x388] sm:$0xff] %vm43, %v1372
  %1447 = vst.msk [vmem:[#allocation2 + $0x390] sm:$0xff] %vm43, %v1377
  %1448 = vst.msk [vmem:[#allocation2 + $0x398] sm:$0xff] %vm43, %v1382
  %1449 = vst.msk [vmem:[#allocation2 + $0x3a0] sm:$0xff] %vm43, %v1387
  %1450 = vst.msk [vmem:[#allocation2 + $0x3a8] sm:$0xff] %vm43, %v1392
  %1451 = vst.msk [vmem:[#allocation2 + $0x3b0] sm:$0xff] %vm43, %v1397
  %1452 = vst.msk [vmem:[#allocation2 + $0x3b8] sm:$0xff] %vm43, %v1402
  %1453 = vst.msk [vmem:[#allocation2 + $0x3c0] sm:$0xff] %vm43, %v1407
  %1454 = vst.msk [vmem:[#allocation2 + $0x3c8] sm:$0xff] %vm43, %v1412
  %1455 = vst.msk [vmem:[#allocation2 + $0x3d0] sm:$0xff] %vm43, %v1417
  %1456 = vst.msk [vmem:[#allocation2 + $0x3d8] sm:$0xff] %vm43, %v1422
  %1457 = vst.msk [vmem:[#allocation2 + $0x3e0] sm:$0xff] %vm43, %v1427
  %1458 = vst.msk [vmem:[#allocation2 + $0x3e8] sm:$0xff] %vm43, %v1432
  %1459 = vst.msk [vmem:[#allocation2 + $0x3f0] sm:$0xff] %vm43, %v1437
  %1460 = vst.msk [vmem:[#allocation2 + $0x3f8] sm:$0xff] %vm43, %v1442
  %s1461 = scalar_lea.vmem %s0, 448
  %v1462 = vld [vmem:[%s1461] sm:$0xff]
  %v1463 = vld [vmem:[%s1461 + $0x8] sm:$0xff]
  %v1464 = vld [vmem:[%s1461 + $0x10] sm:$0xff]
  %v1465 = vld [vmem:[%s1461 + $0x18] sm:$0xff]
  %v1466 = vld [vmem:[%s1461 + $0x20] sm:$0xff]
  %v1467 = vld [vmem:[%s1461 + $0x28] sm:$0xff]
  %v1468 = vld [vmem:[%s1461 + $0x30] sm:$0x1]
  %v1470 = vsel %vm92, %v1468, 0
  %1472 = vmatprep.subr.mxu0 0.0
  %1473 = vmatpush1.msra.mxu0 %v1462
  %1474 = vmatprep.subr.mxu0 0.0
  %1475 = vmatpush1.msra.mxu0 %v1463
  %1476 = vmatprep.subr.mxu0 0.0
  %1477 = vmatpush1.msra.mxu0 %v1464
  %1478 = vmatprep.subr.mxu0 0.0
  %1479 = vmatpush1.msra.mxu0 %v1465
  %1480 = vmatprep.subr.mxu0 0.0
  %1481 = vmatpush1.msra.mxu0 %v1466
  %1482 = vmatprep.subr.mxu0 0.0
  %1483 = vmatpush1.msra.mxu0 %v1467
  %1484 = vmatprep.subr.mxu0 0.0
  %1485 = vmatpush1.msra.mxu0 %v1470
  %1486 = vmatprep.subr.mxu0 0.0
  %1487 = vmatpush1.msra.mxu0 0.0
  %1488 = vmatprep.subr.mxu0 0.0
  %1489 = vmatpush1.msra.mxu0 0.0
  %1490 = vmatprep.subr.mxu0 0.0
  %1491 = vmatpush1.msra.mxu0 0.0
  %1492 = vmatprep.subr.mxu0 0.0
  %1493 = vmatpush1.msra.mxu0 0.0
  %1494 = vmatprep.subr.mxu0 0.0
  %1495 = vmatpush1.msra.mxu0 0.0
  %1496 = vmatprep.subr.mxu0 0.0
  %1497 = vmatpush1.msra.mxu0 0.0
  %1498 = vmatprep.subr.mxu0 0.0
  %1499 = vmatpush1.msra.mxu0 0.0
  %1500 = vmatprep.subr.mxu0 0.0
  %1501 = vmatpush1.msra.mxu0 0.0
  %1502 = vmatprep.subr.mxu0 0.0
  %1503 = vmatpush1.msra.mxu0 0.0
  %1504 = vmatprep.subr.mxu0 0.0
  %1505 = vmatpush1.msra.mxu0 0.0
  %1506 = vmatprep.subr.mxu0 0.0
  %1507 = vmatpush1.msra.mxu0 0.0
  %1508 = vmatprep.subr.mxu0 0.0
  %1509 = vmatpush1.msra.mxu0 0.0
  %1510 = vmatprep.subr.mxu0 0.0
  %1511 = vmatpush1.msra.mxu0 0.0
  %1512 = vmatprep.subr.mxu0 0.0
  %1513 = vmatpush1.msra.mxu0 0.0
  %1514 = vmatprep.subr.mxu0 0.0
  %1515 = vmatpush1.msra.mxu0 0.0
  %1516 = vmatprep.subr.mxu0 0.0
  %1517 = vmatpush1.msra.mxu0 0.0
  %1518 = vmatprep.subr.mxu0 0.0
  %1519 = vmatpush1.msra.mxu0 0.0
  %1520 = vmatprep.subr.mxu0 0.0
  %1521 = vmatpush1.msra.mxu0 0.0
  %1522 = vmatprep.subr.mxu0 0.0
  %1523 = vmatpush1.msra.mxu0 0.0
  %1524 = vmatprep.subr.mxu0 0.0
  %1525 = vmatpush1.msra.mxu0 0.0
  %1526 = vmatprep.subr.mxu0 0.0
  %1527 = vmatpush1.msra.mxu0 0.0
  %1528 = vmatprep.subr.mxu0 0.0
  %1529 = vmatpush1.msra.mxu0 0.0
  %1530 = vmatprep.subr.mxu0 0.0
  %1531 = vmatpush1.msra.mxu0 0.0
  %1532 = vmatprep.subr.mxu0 0.0
  %1533 = vmatpush1.msra.mxu0 0.0
  %1534 = vmatprep.subr.mxu0 0.0
  %1535 = vmatpush1.msra.mxu0 0.0
  %1536 = vmatprep.mubr.f32.mxu0 0.0
  %1537 = vmatmul.mubr.f32.gmra.mrb[0].mxu0 %v45
  %v1538 = vpop.f32.mrb[0].mxu0
  %v1539 = vadd.f32 0.0, %v1538
  %v1540 = vpop.f32.mrb[0].mxu0
  %1541 = vmatprep.mubr.f32.mxu0 0.0
  %1542 = vmatmul.mubr.f32.gmra.mrb[0].mxu0 %v48
  %v1543 = vpop.f32.mrb[0].mxu0
  %v1544 = vadd.f32 0.0, %v1543
  %v1545 = vpop.f32.mrb[0].mxu0
  %1546 = vmatprep.mubr.f32.mxu0 0.0
  %1547 = vmatmul.mubr.f32.gmra.mrb[0].mxu0 %v51
  %v1548 = vpop.f32.mrb[0].mxu0
  %v1549 = vadd.f32 0.0, %v1548
  %v1550 = vpop.f32.mrb[0].mxu0
  %1551 = vmatprep.mubr.f32.mxu0 0.0
  %1552 = vmatmul.mubr.f32.gmra.mrb[0].mxu0 %v54
  %v1553 = vpop.f32.mrb[0].mxu0
  %v1554 = vadd.f32 0.0, %v1553
  %v1555 = vpop.f32.mrb[0].mxu0
  %1556 = vmatprep.mubr.f32.mxu0 0.0
  %1557 = vmatmul.mubr.f32.gmra.mrb[0].mxu0 %v57
  %v1558 = vpop.f32.mrb[0].mxu0
  %v1559 = vadd.f32 0.0, %v1558
  %v1560 = vpop.f32.mrb[0].mxu0
  %1561 = vmatprep.mubr.f32.mxu0 0.0
  %1562 = vmatmul.mubr.f32.gmra.mrb[0].mxu0 %v60
  %v1563 = vpop.f32.mrb[0].mxu0
  %v1564 = vadd.f32 0.0, %v1563
  %v1565 = vpop.f32.mrb[0].mxu0
  %1566 = vmatprep.mubr.f32.mxu0 0.0
  %1567 = vmatmul.mubr.f32.gmra.mrb[0].mxu0 %v63
  %v1568 = vpop.f32.mrb[0].mxu0
  %v1569 = vadd.f32 0.0, %v1568
  %v1570 = vpop.f32.mrb[0].mxu0
  %1571 = vmatprep.mubr.f32.mxu0 0.0
  %1572 = vmatmul.mubr.f32.gmra.mrb[0].mxu0 %v66
  %v1573 = vpop.f32.mrb[0].mxu0
  %v1574 = vadd.f32 0.0, %v1573
  %v1575 = vpop.f32.mrb[0].mxu0
  %1576 = vmatprep.mubr.f32.mxu0 0.0
  %1577 = vmatmul.mubr.f32.gmra.mrb[0].mxu0 %v69
  %v1578 = vpop.f32.mrb[0].mxu0
  %v1579 = vadd.f32 0.0, %v1578
  %v1580 = vpop.f32.mrb[0].mxu0
  %1581 = vmatprep.mubr.f32.mxu0 0.0
  %1582 = vmatmul.mubr.f32.gmra.mrb[0].mxu0 %v72
  %v1583 = vpop.f32.mrb[0].mxu0
  %v1584 = vadd.f32 0.0, %v1583
  %v1585 = vpop.f32.mrb[0].mxu0
  %1586 = vmatprep.mubr.f32.mxu0 0.0
  %1587 = vmatmul.mubr.f32.gmra.mrb[0].mxu0 %v75
  %v1588 = vpop.f32.mrb[0].mxu0
  %v1589 = vadd.f32 0.0, %v1588
  %v1590 = vpop.f32.mrb[0].mxu0
  %1591 = vmatprep.mubr.f32.mxu0 0.0
  %1592 = vmatmul.mubr.f32.gmra.mrb[0].mxu0 %v78
  %v1593 = vpop.f32.mrb[0].mxu0
  %v1594 = vadd.f32 0.0, %v1593
  %v1595 = vpop.f32.mrb[0].mxu0
  %1596 = vmatprep.mubr.f32.mxu0 0.0
  %1597 = vmatmul.mubr.f32.gmra.mrb[0].mxu0 %v81
  %v1598 = vpop.f32.mrb[0].mxu0
  %v1599 = vadd.f32 0.0, %v1598
  %v1600 = vpop.f32.mrb[0].mxu0
  %1601 = vmatprep.mubr.f32.mxu0 0.0
  %1602 = vmatmul.mubr.f32.gmra.mrb[0].mxu0 %v84
  %v1603 = vpop.f32.mrb[0].mxu0
  %v1604 = vadd.f32 0.0, %v1603
  %v1605 = vpop.f32.mrb[0].mxu0
  %1606 = vmatprep.mubr.f32.mxu0 0.0
  %1607 = vmatmul.mubr.f32.gmra.mrb[0].mxu0 %v87
  %v1608 = vpop.f32.mrb[0].mxu0
  %v1609 = vadd.f32 0.0, %v1608
  %v1610 = vpop.f32.mrb[0].mxu0
  %1611 = vmatprep.mubr.f32.mxu0 0.0
  %1612 = vmatmul.mubr.f32.gmra.mrb[0].mxu0 %v90
  %v1613 = vpop.f32.mrb[0].mxu0
  %v1614 = vadd.f32 0.0, %v1613
  %v1615 = vpop.f32.mrb[0].mxu0
  %1616 = vdwg.mxu0
  %1617 = vst.msk [vmem:[#allocation2 + $0x400] sm:$0xff] %vm43, %v1539
  %1618 = vst.msk [vmem:[#allocation2 + $0x408] sm:$0xff] %vm43, %v1544
  %1619 = vst.msk [vmem:[#allocation2 + $0x410] sm:$0xff] %vm43, %v1549
  %1620 = vst.msk [vmem:[#allocation2 + $0x418] sm:$0xff] %vm43, %v1554
  %1621 = vst.msk [vmem:[#allocation2 + $0x420] sm:$0xff] %vm43, %v1559
  %1622 = vst.msk [vmem:[#allocation2 + $0x428] sm:$0xff] %vm43, %v1564
  %1623 = vst.msk [vmem:[#allocation2 + $0x430] sm:$0xff] %vm43, %v1569
  %1624 = vst.msk [vmem:[#allocation2 + $0x438] sm:$0xff] %vm43, %v1574
  %1625 = vst.msk [vmem:[#allocation2 + $0x440] sm:$0xff] %vm43, %v1579
  %1626 = vst.msk [vmem:[#allocation2 + $0x448] sm:$0xff] %vm43, %v1584
  %1627 = vst.msk [vmem:[#allocation2 + $0x450] sm:$0xff] %vm43, %v1589
  %1628 = vst.msk [vmem:[#allocation2 + $0x458] sm:$0xff] %vm43, %v1594
  %1629 = vst.msk [vmem:[#allocation2 + $0x460] sm:$0xff] %vm43, %v1599
  %1630 = vst.msk [vmem:[#allocation2 + $0x468] sm:$0xff] %vm43, %v1604
  %1631 = vst.msk [vmem:[#allocation2 + $0x470] sm:$0xff] %vm43, %v1609
  %1632 = vst.msk [vmem:[#allocation2 + $0x478] sm:$0xff] %vm43, %v1614
  %v1633 = vld [vmem:[%s1] sm:$0xff]
  %v1634 = vld [vmem:[%s1 + $0x8] sm:$0xff]
  %v1635 = vld [vmem:[%s1 + $0x10] sm:$0xff]
  %v1636 = vld [vmem:[%s1 + $0x18] sm:$0xff]
  %v1637 = vld [vmem:[%s1 + $0x20] sm:$0xff]
  %v1638 = vld [vmem:[%s1 + $0x28] sm:$0xff]
  %v1639 = vld [vmem:[%s1 + $0x30] sm:$0xff]
  %v1640 = vld [vmem:[%s1 + $0x38] sm:$0xff]
  %v1641 = vld [vmem:[%s1 + $0x40] sm:$0xff]
  %v1642 = vld [vmem:[%s1 + $0x48] sm:$0xff]
  %v1643 = vld [vmem:[%s1 + $0x50] sm:$0xff]
  %v1644 = vld [vmem:[%s1 + $0x58] sm:$0xff]
  %v1645 = vld [vmem:[%s1 + $0x60] sm:$0xff]
  %v1646 = vld [vmem:[%s1 + $0x68] sm:$0xff]
  %v1647 = vld [vmem:[%s1 + $0x70] sm:$0xff]
  %v1648 = vld [vmem:[%s1 + $0x78] sm:$0xff]
  %v1649 = vld [vmem:[%s1 + $0x80] sm:$0xff]
  %v1650 = vld [vmem:[%s1 + $0x88] sm:$0xff]
  %v1651 = vld [vmem:[%s1 + $0x90] sm:$0xff]
  %v1652 = vld [vmem:[%s1 + $0x98] sm:$0xff]
  %v1653 = vld [vmem:[%s1 + $0xa0] sm:$0xff]
  %v1654 = vld [vmem:[%s1 + $0xa8] sm:$0xff]
  %v1655 = vld [vmem:[%s1 + $0xb0] sm:$0xff]
  %v1656 = vld [vmem:[%s1 + $0xb8] sm:$0xff]
  %v1657 = vld [vmem:[%s1 + $0xc0] sm:$0xff]
  %v1658 = vld [vmem:[%s1 + $0xc8] sm:$0xff]
  %v1659 = vld [vmem:[%s1 + $0xd0] sm:$0xff]
  %v1660 = vld [vmem:[%s1 + $0xd8] sm:$0xff]
  %v1661 = vld [vmem:[%s1 + $0xe0] sm:$0xff]
  %v1662 = vld [vmem:[%s1 + $0xe8] sm:$0xff]
  %v1663 = vld [vmem:[%s1 + $0xf0] sm:$0xff]
  %v1664 = vld [vmem:[%s1 + $0xf8] sm:$0xff]
  %v1665 = vld [vmem:[%s1 + $0x100] sm:$0xff]
  %v1666 = vld [vmem:[%s1 + $0x108] sm:$0xff]
  %v1667 = vld [vmem:[%s1 + $0x110] sm:$0xff]
  %v1668 = vld [vmem:[%s1 + $0x118] sm:$0xff]
  %v1669 = vld [vmem:[#allocation2] sm:$0xff]
  %v1670 = vld [vmem:[#allocation2 + $0x8] sm:$0xff]
  %v1671 = vld [vmem:[#allocation2 + $0x10] sm:$0xff]
  %v1672 = vld [vmem:[#allocation2 + $0x18] sm:$0xff]
  %v1673 = vld [vmem:[#allocation2 + $0x20] sm:$0xff]
  %v1674 = vld [vmem:[#allocation2 + $0x28] sm:$0xff]
  %v1675 = vld [vmem:[#allocation2 + $0x30] sm:$0xff]
  %v1676 = vld [vmem:[#allocation2 + $0x38] sm:$0xff]
  %v1677 = vld [vmem:[#allocation2 + $0x40] sm:$0xff]
  %v1678 = vld [vmem:[#allocation2 + $0x48] sm:$0xff]
  %v1679 = vld [vmem:[#allocation2 + $0x50] sm:$0xff]
  %v1680 = vld [vmem:[#allocation2 + $0x58] sm:$0xff]
  %v1681 = vld [vmem:[#allocation2 + $0x60] sm:$0xff]
  %v1682 = vld [vmem:[#allocation2 + $0x68] sm:$0xff]
  %v1683 = vld [vmem:[#allocation2 + $0x70] sm:$0xff]
  %v1684 = vld [vmem:[#allocation2 + $0x78] sm:$0xff]
  %v1685 = vld [vmem:[#allocation2 + $0x80] sm:$0xff]
  %v1686 = vld [vmem:[#allocation2 + $0x88] sm:$0xff]
  %v1687 = vld [vmem:[#allocation2 + $0x90] sm:$0xff]
  %v1688 = vld [vmem:[#allocation2 + $0x98] sm:$0xff]
  %v1689 = vld [vmem:[#allocation2 + $0xa0] sm:$0xff]
  %v1690 = vld [vmem:[#allocation2 + $0xa8] sm:$0xff]
  %v1691 = vld [vmem:[#allocation2 + $0xb0] sm:$0xff]
  %v1692 = vld [vmem:[#allocation2 + $0xb8] sm:$0xff]
  %v1693 = vld [vmem:[#allocation2 + $0xc0] sm:$0xff]
  %v1694 = vld [vmem:[#allocation2 + $0xc8] sm:$0xff]
  %v1695 = vld [vmem:[#allocation2 + $0xd0] sm:$0xff]
  %v1696 = vld [vmem:[#allocation2 + $0xd8] sm:$0xff]
  %v1697 = vld [vmem:[#allocation2 + $0xe0] sm:$0xff]
  %v1698 = vld [vmem:[#allocation2 + $0xe8] sm:$0xff]
  %v1699 = vld [vmem:[#allocation2 + $0xf0] sm:$0xff]
  %v1700 = vld [vmem:[#allocation2 + $0xf8] sm:$0xff]
  %v1701 = vld [vmem:[#allocation2 + $0x100] sm:$0xff]
  %v1702 = vld [vmem:[#allocation2 + $0x108] sm:$0xff]
  %v1703 = vld [vmem:[#allocation2 + $0x110] sm:$0xff]
  %v1704 = vld [vmem:[#allocation2 + $0x118] sm:$0xff]
  %v1705 = vld [vmem:[#allocation2 + $0x120] sm:$0xff]
  %v1706 = vld [vmem:[#allocation2 + $0x128] sm:$0xff]
  %v1707 = vld [vmem:[#allocation2 + $0x130] sm:$0xff]
  %v1708 = vld [vmem:[#allocation2 + $0x138] sm:$0xff]
  %v1709 = vld [vmem:[#allocation2 + $0x140] sm:$0xff]
  %v1710 = vld [vmem:[#allocation2 + $0x148] sm:$0xff]
  %v1711 = vld [vmem:[#allocation2 + $0x150] sm:$0xff]
  %v1712 = vld [vmem:[#allocation2 + $0x158] sm:$0xff]
  %v1713 = vld [vmem:[#allocation2 + $0x160] sm:$0xff]
  %v1714 = vld [vmem:[#allocation2 + $0x168] sm:$0xff]
  %v1715 = vld [vmem:[#allocation2 + $0x170] sm:$0xff]
  %v1716 = vld [vmem:[#allocation2 + $0x178] sm:$0xff]
  %v1717 = vld [vmem:[#allocation2 + $0x180] sm:$0xff]
  %v1718 = vld [vmem:[#allocation2 + $0x188] sm:$0xff]
  %v1719 = vld [vmem:[#allocation2 + $0x190] sm:$0xff]
  %v1720 = vld [vmem:[#allocation2 + $0x198] sm:$0xff]
  %v1721 = vld [vmem:[#allocation2 + $0x1a0] sm:$0xff]
  %v1722 = vld [vmem:[#allocation2 + $0x1a8] sm:$0xff]
  %v1723 = vld [vmem:[#allocation2 + $0x1b0] sm:$0xff]
  %v1724 = vld [vmem:[#allocation2 + $0x1b8] sm:$0xff]
  %v1725 = vld [vmem:[#allocation2 + $0x1c0] sm:$0xff]
  %v1726 = vld [vmem:[#allocation2 + $0x1c8] sm:$0xff]
  %v1727 = vld [vmem:[#allocation2 + $0x1d0] sm:$0xff]
  %v1728 = vld [vmem:[#allocation2 + $0x1d8] sm:$0xff]
  %v1729 = vld [vmem:[#allocation2 + $0x1e0] sm:$0xff]
  %v1730 = vld [vmem:[#allocation2 + $0x1e8] sm:$0xff]
  %v1731 = vld [vmem:[#allocation2 + $0x1f0] sm:$0xff]
  %v1732 = vld [vmem:[#allocation2 + $0x1f8] sm:$0xff]
  %v1733 = vld [vmem:[#allocation2 + $0x200] sm:$0xff]
  %v1734 = vld [vmem:[#allocation2 + $0x208] sm:$0xff]
  %v1735 = vld [vmem:[#allocation2 + $0x210] sm:$0xff]
  %v1736 = vld [vmem:[#allocation2 + $0x218] sm:$0xff]
  %v1737 = vld [vmem:[#allocation2 + $0x220] sm:$0xff]
  %v1738 = vld [vmem:[#allocation2 + $0x228] sm:$0xff]
  %v1739 = vld [vmem:[#allocation2 + $0x230] sm:$0xff]
  %v1740 = vld [vmem:[#allocation2 + $0x238] sm:$0xff]
  %v1741 = vld [vmem:[#allocation2 + $0x240] sm:$0xff]
  %v1742 = vld [vmem:[#allocation2 + $0x248] sm:$0xff]
  %v1743 = vld [vmem:[#allocation2 + $0x250] sm:$0xff]
  %v1744 = vld [vmem:[#allocation2 + $0x258] sm:$0xff]
  %v1745 = vld [vmem:[#allocation2 + $0x260] sm:$0xff]
  %v1746 = vld [vmem:[#allocation2 + $0x268] sm:$0xff]
  %v1747 = vld [vmem:[#allocation2 + $0x270] sm:$0xff]
  %v1748 = vld [vmem:[#allocation2 + $0x278] sm:$0xff]
  %v1749 = vld [vmem:[#allocation2 + $0x280] sm:$0xff]
  %v1750 = vld [vmem:[#allocation2 + $0x288] sm:$0xff]
  %v1751 = vld [vmem:[#allocation2 + $0x290] sm:$0xff]
  %v1752 = vld [vmem:[#allocation2 + $0x298] sm:$0xff]
  %v1753 = vld [vmem:[#allocation2 + $0x2a0] sm:$0xff]
  %v1754 = vld [vmem:[#allocation2 + $0x2a8] sm:$0xff]
  %v1755 = vld [vmem:[#allocation2 + $0x2b0] sm:$0xff]
  %v1756 = vld [vmem:[#allocation2 + $0x2b8] sm:$0xff]
  %v1757 = vld [vmem:[#allocation2 + $0x2c0] sm:$0xff]
  %v1758 = vld [vmem:[#allocation2 + $0x2c8] sm:$0xff]
  %v1759 = vld [vmem:[#allocation2 + $0x2d0] sm:$0xff]
  %v1760 = vld [vmem:[#allocation2 + $0x2d8] sm:$0xff]
  %v1761 = vld [vmem:[#allocation2 + $0x2e0] sm:$0xff]
  %v1762 = vld [vmem:[#allocation2 + $0x2e8] sm:$0xff]
  %v1763 = vld [vmem:[#allocation2 + $0x2f0] sm:$0xff]
  %v1764 = vld [vmem:[#allocation2 + $0x2f8] sm:$0xff]
  %v1765 = vld [vmem:[#allocation2 + $0x300] sm:$0xff]
  %v1766 = vld [vmem:[#allocation2 + $0x308] sm:$0xff]
  %v1767 = vld [vmem:[#allocation2 + $0x310] sm:$0xff]
  %v1768 = vld [vmem:[#allocation2 + $0x318] sm:$0xff]
  %v1769 = vld [vmem:[#allocation2 + $0x320] sm:$0xff]
  %v1770 = vld [vmem:[#allocation2 + $0x328] sm:$0xff]
  %v1771 = vld [vmem:[#allocation2 + $0x330] sm:$0xff]
  %v1772 = vld [vmem:[#allocation2 + $0x338] sm:$0xff]
  %v1773 = vld [vmem:[#allocation2 + $0x340] sm:$0xff]
  %v1774 = vld [vmem:[#allocation2 + $0x348] sm:$0xff]
  %v1775 = vld [vmem:[#allocation2 + $0x350] sm:$0xff]
  %v1776 = vld [vmem:[#allocation2 + $0x358] sm:$0xff]
  %v1777 = vld [vmem:[#allocation2 + $0x360] sm:$0xff]
  %v1778 = vld [vmem:[#allocation2 + $0x368] sm:$0xff]
  %v1779 = vld [vmem:[#allocation2 + $0x370] sm:$0xff]
  %v1780 = vld [vmem:[#allocation2 + $0x378] sm:$0xff]
  %v1781 = vld [vmem:[#allocation2 + $0x380] sm:$0xff]
  %v1782 = vld [vmem:[#allocation2 + $0x388] sm:$0xff]
  %v1783 = vld [vmem:[#allocation2 + $0x390] sm:$0xff]
  %v1784 = vld [vmem:[#allocation2 + $0x398] sm:$0xff]
  %v1785 = vld [vmem:[#allocation2 + $0x3a0] sm:$0xff]
  %v1786 = vld [vmem:[#allocation2 + $0x3a8] sm:$0xff]
  %v1787 = vld [vmem:[#allocation2 + $0x3b0] sm:$0xff]
  %v1788 = vld [vmem:[#allocation2 + $0x3b8] sm:$0xff]
  %v1789 = vld [vmem:[#allocation2 + $0x3c0] sm:$0xff]
  %v1790 = vld [vmem:[#allocation2 + $0x3c8] sm:$0xff]
  %v1791 = vld [vmem:[#allocation2 + $0x3d0] sm:$0xff]
  %v1792 = vld [vmem:[#allocation2 + $0x3d8] sm:$0xff]
  %v1793 = vld [vmem:[#allocation2 + $0x3e0] sm:$0xff]
  %v1794 = vld [vmem:[#allocation2 + $0x3e8] sm:$0xff]
  %v1795 = vld [vmem:[#allocation2 + $0x3f0] sm:$0xff]
  %v1796 = vld [vmem:[#allocation2 + $0x3f8] sm:$0xff]
  %v1797 = vld [vmem:[#allocation2 + $0x400] sm:$0xff]
  %v1798 = vld [vmem:[#allocation2 + $0x408] sm:$0xff]
  %v1799 = vld [vmem:[#allocation2 + $0x410] sm:$0xff]
  %v1800 = vld [vmem:[#allocation2 + $0x418] sm:$0xff]
  %v1801 = vld [vmem:[#allocation2 + $0x420] sm:$0xff]
  %v1802 = vld [vmem:[#allocation2 + $0x428] sm:$0xff]
  %v1803 = vld [vmem:[#allocation2 + $0x430] sm:$0xff]
  %v1804 = vld [vmem:[#allocation2 + $0x438] sm:$0xff]
  %v1805 = vld [vmem:[#allocation2 + $0x440] sm:$0xff]
  %v1806 = vld [vmem:[#allocation2 + $0x448] sm:$0xff]
  %v1807 = vld [vmem:[#allocation2 + $0x450] sm:$0xff]
  %v1808 = vld [vmem:[#allocation2 + $0x458] sm:$0xff]
  %v1809 = vld [vmem:[#allocation2 + $0x460] sm:$0xff]
  %v1810 = vld [vmem:[#allocation2 + $0x468] sm:$0xff]
  %v1811 = vld [vmem:[#allocation2 + $0x470] sm:$0xff]
  %v1812 = vld [vmem:[#allocation2 + $0x478] sm:$0xff]
  %1813 = vmatprep.subr.mxu0 0.0
  %1814 = vmatpush1.msra.mxu0 %v1669
  %1815 = vmatprep.subr.mxu0 0.0
  %1816 = vmatpush1.msra.mxu0 %v1670
  %1817 = vmatprep.subr.mxu0 0.0
  %1818 = vmatpush1.msra.mxu0 %v1671
  %1819 = vmatprep.subr.mxu0 0.0
  %1820 = vmatpush1.msra.mxu0 %v1672
  %1821 = vmatprep.subr.mxu0 0.0
  %1822 = vmatpush1.msra.mxu0 %v1673
  %1823 = vmatprep.subr.mxu0 0.0
  %1824 = vmatpush1.msra.mxu0 %v1674
  %1825 = vmatprep.subr.mxu0 0.0
  %1826 = vmatpush1.msra.mxu0 %v1675
  %1827 = vmatprep.subr.mxu0 0.0
  %1828 = vmatpush1.msra.mxu0 %v1676
  %1829 = vmatprep.subr.mxu0 0.0
  %1830 = vmatpush1.msra.mxu0 %v1677
  %1831 = vmatprep.subr.mxu0 0.0
  %1832 = vmatpush1.msra.mxu0 %v1678
  %1833 = vmatprep.subr.mxu0 0.0
  %1834 = vmatpush1.msra.mxu0 %v1679
  %1835 = vmatprep.subr.mxu0 0.0
  %1836 = vmatpush1.msra.mxu0 %v1680
  %1837 = vmatprep.subr.mxu0 0.0
  %1838 = vmatpush1.msra.mxu0 %v1681
  %1839 = vmatprep.subr.mxu0 0.0
  %1840 = vmatpush1.msra.mxu0 %v1682
  %1841 = vmatprep.subr.mxu0 0.0
  %1842 = vmatpush1.msra.mxu0 %v1683
  %1843 = vmatprep.subr.mxu0 0.0
  %1844 = vmatpush1.msra.mxu0 %v1684
  %1845 = vmatprep.subr.mxu0 0.0
  %1846 = vmatpush1.msra.mxu0 %v1685
  %1847 = vmatprep.subr.mxu0 0.0
  %1848 = vmatpush1.msra.mxu0 %v1686
  %1849 = vmatprep.subr.mxu0 0.0
  %1850 = vmatpush1.msra.mxu0 %v1687
  %1851 = vmatprep.subr.mxu0 0.0
  %1852 = vmatpush1.msra.mxu0 %v1688
  %1853 = vmatprep.subr.mxu0 0.0
  %1854 = vmatpush1.msra.mxu0 %v1689
  %1855 = vmatprep.subr.mxu0 0.0
  %1856 = vmatpush1.msra.mxu0 %v1690
  %1857 = vmatprep.subr.mxu0 0.0
  %1858 = vmatpush1.msra.mxu0 %v1691
  %1859 = vmatprep.subr.mxu0 0.0
  %1860 = vmatpush1.msra.mxu0 %v1692
  %1861 = vmatprep.subr.mxu0 0.0
  %1862 = vmatpush1.msra.mxu0 %v1693
  %1863 = vmatprep.subr.mxu0 0.0
  %1864 = vmatpush1.msra.mxu0 %v1694
  %1865 = vmatprep.subr.mxu0 0.0
  %1866 = vmatpush1.msra.mxu0 %v1695
  %1867 = vmatprep.subr.mxu0 0.0
  %1868 = vmatpush1.msra.mxu0 %v1696
  %1869 = vmatprep.subr.mxu0 0.0
  %1870 = vmatpush1.msra.mxu0 %v1697
  %1871 = vmatprep.subr.mxu0 0.0
  %1872 = vmatpush1.msra.mxu0 %v1698
  %1873 = vmatprep.subr.mxu0 0.0
  %1874 = vmatpush1.msra.mxu0 %v1699
  %1875 = vmatprep.subr.mxu0 0.0
  %1876 = vmatpush1.msra.mxu0 %v1700
  %1877 = vmatprep.mubr.f32.mxu0 %v1634
  %1878 = vmatmul.mubr.f32.gmra.mrb[0].mxu0 %v1633
  %v1879 = vpop.f32.mrb[0].mxu0
  %v1880 = vadd.f32 0.0, %v1879
  %v1881 = vpop.f32.mrb[0].mxu0
  %1882 = vmatprep.mubr.f32.mxu0 %v1643
  %1883 = vmatmul.mubr.f32.gmra.mrb[0].mxu0 %v1642
  %v1884 = vpop.f32.mrb[0].mxu0
  %v1885 = vadd.f32 0.0, %v1884
  %v1886 = vpop.f32.mrb[0].mxu0
  %1887 = vmatprep.mubr.f32.mxu0 %v1652
  %1888 = vmatmul.mubr.f32.gmra.mrb[0].mxu0 %v1651
  %v1889 = vpop.f32.mrb[0].mxu0
  %v1890 = vadd.f32 0.0, %v1889
  %v1891 = vpop.f32.mrb[0].mxu0
  %1892 = vmatprep.mubr.f32.mxu0 %v1661
  %1893 = vmatmul.mubr.f32.gmra.mrb[0].mxu0 %v1660
  %v1894 = vpop.f32.mrb[0].mxu0
  %v1895 = vadd.f32 0.0, %v1894
  %v1896 = vpop.f32.mrb[0].mxu0
  %1897 = vdwg.mxu0
  %1898 = vmatprep.subr.mxu0 0.0
  %1899 = vmatpush1.msra.mxu0 %v1701
  %1900 = vmatprep.subr.mxu0 0.0
  %1901 = vmatpush1.msra.mxu0 %v1702
  %1902 = vmatprep.subr.mxu0 0.0
  %1903 = vmatpush1.msra.mxu0 %v1703
  %1904 = vmatprep.subr.mxu0 0.0
  %1905 = vmatpush1.msra.mxu0 %v1704
  %1906 = vmatprep.subr.mxu0 0.0
  %1907 = vmatpush1.msra.mxu0 %v1705
  %1908 = vmatprep.subr.mxu0 0.0
  %1909 = vmatpush1.msra.mxu0 %v1706
  %1910 = vmatprep.subr.mxu0 0.0
  %1911 = vmatpush1.msra.mxu0 %v1707
  %1912 = vmatprep.subr.mxu0 0.0
  %1913 = vmatpush1.msra.mxu0 %v1708
  %1914 = vmatprep.subr.mxu0 0.0
  %1915 = vmatpush1.msra.mxu0 %v1709
  %1916 = vmatprep.subr.mxu0 0.0
  %1917 = vmatpush1.msra.mxu0 %v1710
  %1918 = vmatprep.subr.mxu0 0.0
  %1919 = vmatpush1.msra.mxu0 %v1711
  %1920 = vmatprep.subr.mxu0 0.0
  %1921 = vmatpush1.msra.mxu0 %v1712
  %1922 = vmatprep.subr.mxu0 0.0
  %1923 = vmatpush1.msra.mxu0 %v1713
  %1924 = vmatprep.subr.mxu0 0.0
  %1925 = vmatpush1.msra.mxu0 %v1714
  %1926 = vmatprep.subr.mxu0 0.0
  %1927 = vmatpush1.msra.mxu0 %v1715
  %1928 = vmatprep.subr.mxu0 0.0
  %1929 = vmatpush1.msra.mxu0 %v1716
  %1930 = vmatprep.subr.mxu0 0.0
  %1931 = vmatpush1.msra.mxu0 %v1717
  %1932 = vmatprep.subr.mxu0 0.0
  %1933 = vmatpush1.msra.mxu0 %v1718
  %1934 = vmatprep.subr.mxu0 0.0
  %1935 = vmatpush1.msra.mxu0 %v1719
  %1936 = vmatprep.subr.mxu0 0.0
  %1937 = vmatpush1.msra.mxu0 %v1720
  %1938 = vmatprep.subr.mxu0 0.0
  %1939 = vmatpush1.msra.mxu0 %v1721
  %1940 = vmatprep.subr.mxu0 0.0
  %1941 = vmatpush1.msra.mxu0 %v1722
  %1942 = vmatprep.subr.mxu0 0.0
  %1943 = vmatpush1.msra.mxu0 %v1723
  %1944 = vmatprep.subr.mxu0 0.0
  %1945 = vmatpush1.msra.mxu0 %v1724
  %1946 = vmatprep.subr.mxu0 0.0
  %1947 = vmatpush1.msra.mxu0 %v1725
  %1948 = vmatprep.subr.mxu0 0.0
  %1949 = vmatpush1.msra.mxu0 %v1726
  %1950 = vmatprep.subr.mxu0 0.0
  %1951 = vmatpush1.msra.mxu0 %v1727
  %1952 = vmatprep.subr.mxu0 0.0
  %1953 = vmatpush1.msra.mxu0 %v1728
  %1954 = vmatprep.subr.mxu0 0.0
  %1955 = vmatpush1.msra.mxu0 %v1729
  %1956 = vmatprep.subr.mxu0 0.0
  %1957 = vmatpush1.msra.mxu0 %v1730
  %1958 = vmatprep.subr.mxu0 0.0
  %1959 = vmatpush1.msra.mxu0 %v1731
  %1960 = vmatprep.subr.mxu0 0.0
  %1961 = vmatpush1.msra.mxu0 %v1732
  %1962 = vmatprep.mubr.f32.mxu0 %v1636
  %1963 = vmatmul.mubr.f32.gmra.mrb[0].mxu0 %v1635
  %v1964 = vpop.f32.mrb[0].mxu0
  %v1965 = vadd.f32 %v1880, %v1964
  %v1966 = vpop.f32.mrb[0].mxu0
  %1967 = vmatprep.mubr.f32.mxu0 %v1645
  %1968 = vmatmul.mubr.f32.gmra.mrb[0].mxu0 %v1644
  %v1969 = vpop.f32.mrb[0].mxu0
  %v1970 = vadd.f32 %v1885, %v1969
  %v1971 = vpop.f32.mrb[0].mxu0
  %1972 = vmatprep.mubr.f32.mxu0 %v1654
  %1973 = vmatmul.mubr.f32.gmra.mrb[0].mxu0 %v1653
  %v1974 = vpop.f32.mrb[0].mxu0
  %v1975 = vadd.f32 %v1890, %v1974
  %v1976 = vpop.f32.mrb[0].mxu0
  %1977 = vmatprep.mubr.f32.mxu0 %v1663
  %1978 = vmatmul.mubr.f32.gmra.mrb[0].mxu0 %v1662
  %v1979 = vpop.f32.mrb[0].mxu0
  %v1980 = vadd.f32 %v1895, %v1979
  %v1981 = vpop.f32.mrb[0].mxu0
  %1982 = vdwg.mxu0
  %1983 = vmatprep.subr.mxu0 0.0
  %1984 = vmatpush1.msra.mxu0 %v1733
  %1985 = vmatprep.subr.mxu0 0.0
  %1986 = vmatpush1.msra.mxu0 %v1734
  %1987 = vmatprep.subr.mxu0 0.0
  %1988 = vmatpush1.msra.mxu0 %v1735
  %1989 = vmatprep.subr.mxu0 0.0
  %1990 = vmatpush1.msra.mxu0 %v1736
  %1991 = vmatprep.subr.mxu0 0.0
  %1992 = vmatpush1.msra.mxu0 %v1737
  %1993 = vmatprep.subr.mxu0 0.0
  %1994 = vmatpush1.msra.mxu0 %v1738
  %1995 = vmatprep.subr.mxu0 0.0
  %1996 = vmatpush1.msra.mxu0 %v1739
  %1997 = vmatprep.subr.mxu0 0.0
  %1998 = vmatpush1.msra.mxu0 %v1740
  %1999 = vmatprep.subr.mxu0 0.0
  %2000 = vmatpush1.msra.mxu0 %v1741
  %2001 = vmatprep.subr.mxu0 0.0
  %2002 = vmatpush1.msra.mxu0 %v1742
  %2003 = vmatprep.subr.mxu0 0.0
  %2004 = vmatpush1.msra.mxu0 %v1743
  %2005 = vmatprep.subr.mxu0 0.0
  %2006 = vmatpush1.msra.mxu0 %v1744
  %2007 = vmatprep.subr.mxu0 0.0
  %2008 = vmatpush1.msra.mxu0 %v1745
  %2009 = vmatprep.subr.mxu0 0.0
  %2010 = vmatpush1.msra.mxu0 %v1746
  %2011 = vmatprep.subr.mxu0 0.0
  %2012 = vmatpush1.msra.mxu0 %v1747
  %2013 = vmatprep.subr.mxu0 0.0
  %2014 = vmatpush1.msra.mxu0 %v1748
  %2015 = vmatprep.subr.mxu0 0.0
  %2016 = vmatpush1.msra.mxu0 %v1749
  %2017 = vmatprep.subr.mxu0 0.0
  %2018 = vmatpush1.msra.mxu0 %v1750
  %2019 = vmatprep.subr.mxu0 0.0
  %2020 = vmatpush1.msra.mxu0 %v1751
  %2021 = vmatprep.subr.mxu0 0.0
  %2022 = vmatpush1.msra.mxu0 %v1752
  %2023 = vmatprep.subr.mxu0 0.0
  %2024 = vmatpush1.msra.mxu0 %v1753
  %2025 = vmatprep.subr.mxu0 0.0
  %2026 = vmatpush1.msra.mxu0 %v1754
  %2027 = vmatprep.subr.mxu0 0.0
  %2028 = vmatpush1.msra.mxu0 %v1755
  %2029 = vmatprep.subr.mxu0 0.0
  %2030 = vmatpush1.msra.mxu0 %v1756
  %2031 = vmatprep.subr.mxu0 0.0
  %2032 = vmatpush1.msra.mxu0 %v1757
  %2033 = vmatprep.subr.mxu0 0.0
  %2034 = vmatpush1.msra.mxu0 %v1758
  %2035 = vmatprep.subr.mxu0 0.0
  %2036 = vmatpush1.msra.mxu0 %v1759
  %2037 = vmatprep.subr.mxu0 0.0
  %2038 = vmatpush1.msra.mxu0 %v1760
  %2039 = vmatprep.subr.mxu0 0.0
  %2040 = vmatpush1.msra.mxu0 %v1761
  %2041 = vmatprep.subr.mxu0 0.0
  %2042 = vmatpush1.msra.mxu0 %v1762
  %2043 = vmatprep.subr.mxu0 0.0
  %2044 = vmatpush1.msra.mxu0 %v1763
  %2045 = vmatprep.subr.mxu0 0.0
  %2046 = vmatpush1.msra.mxu0 %v1764
  %2047 = vmatprep.mubr.f32.mxu0 %v1638
  %2048 = vmatmul.mubr.f32.gmra.mrb[0].mxu0 %v1637
  %v2049 = vpop.f32.mrb[0].mxu0
  %v2050 = vadd.f32 %v1965, %v2049
  %v2051 = vpop.f32.mrb[0].mxu0
  %2052 = vmatprep.mubr.f32.mxu0 %v1647
  %2053 = vmatmul.mubr.f32.gmra.mrb[0].mxu0 %v1646
  %v2054 = vpop.f32.mrb[0].mxu0
  %v2055 = vadd.f32 %v1970, %v2054
  %v2056 = vpop.f32.mrb[0].mxu0
  %2057 = vmatprep.mubr.f32.mxu0 %v1656
  %2058 = vmatmul.mubr.f32.gmra.mrb[0].mxu0 %v1655
  %v2059 = vpop.f32.mrb[0].mxu0
  %v2060 = vadd.f32 %v1975, %v2059
  %v2061 = vpop.f32.mrb[0].mxu0
  %2062 = vmatprep.mubr.f32.mxu0 %v1665
  %2063 = vmatmul.mubr.f32.gmra.mrb[0].mxu0 %v1664
  %v2064 = vpop.f32.mrb[0].mxu0
  %v2065 = vadd.f32 %v1980, %v2064
  %v2066 = vpop.f32.mrb[0].mxu0
  %2067 = vdwg.mxu0
  %2068 = vmatprep.subr.mxu0 0.0
  %2069 = vmatpush1.msra.mxu0 %v1765
  %2070 = vmatprep.subr.mxu0 0.0
  %2071 = vmatpush1.msra.mxu0 %v1766
  %2072 = vmatprep.subr.mxu0 0.0
  %2073 = vmatpush1.msra.mxu0 %v1767
  %2074 = vmatprep.subr.mxu0 0.0
  %2075 = vmatpush1.msra.mxu0 %v1768
  %2076 = vmatprep.subr.mxu0 0.0
  %2077 = vmatpush1.msra.mxu0 %v1769
  %2078 = vmatprep.subr.mxu0 0.0
  %2079 = vmatpush1.msra.mxu0 %v1770
  %2080 = vmatprep.subr.mxu0 0.0
  %2081 = vmatpush1.msra.mxu0 %v1771
  %2082 = vmatprep.subr.mxu0 0.0
  %2083 = vmatpush1.msra.mxu0 %v1772
  %2084 = vmatprep.subr.mxu0 0.0
  %2085 = vmatpush1.msra.mxu0 %v1773
  %2086 = vmatprep.subr.mxu0 0.0
  %2087 = vmatpush1.msra.mxu0 %v1774
  %2088 = vmatprep.subr.mxu0 0.0
  %2089 = vmatpush1.msra.mxu0 %v1775
  %2090 = vmatprep.subr.mxu0 0.0
  %2091 = vmatpush1.msra.mxu0 %v1776
  %2092 = vmatprep.subr.mxu0 0.0
  %2093 = vmatpush1.msra.mxu0 %v1777
  %2094 = vmatprep.subr.mxu0 0.0
  %2095 = vmatpush1.msra.mxu0 %v1778
  %2096 = vmatprep.subr.mxu0 0.0
  %2097 = vmatpush1.msra.mxu0 %v1779
  %2098 = vmatprep.subr.mxu0 0.0
  %2099 = vmatpush1.msra.mxu0 %v1780
  %2100 = vmatprep.subr.mxu0 0.0
  %2101 = vmatpush1.msra.mxu0 %v1781
  %2102 = vmatprep.subr.mxu0 0.0
  %2103 = vmatpush1.msra.mxu0 %v1782
  %2104 = vmatprep.subr.mxu0 0.0
  %2105 = vmatpush1.msra.mxu0 %v1783
  %2106 = vmatprep.subr.mxu0 0.0
  %2107 = vmatpush1.msra.mxu0 %v1784
  %2108 = vmatprep.subr.mxu0 0.0
  %2109 = vmatpush1.msra.mxu0 %v1785
  %2110 = vmatprep.subr.mxu0 0.0
  %2111 = vmatpush1.msra.mxu0 %v1786
  %2112 = vmatprep.subr.mxu0 0.0
  %2113 = vmatpush1.msra.mxu0 %v1787
  %2114 = vmatprep.subr.mxu0 0.0
  %2115 = vmatpush1.msra.mxu0 %v1788
  %2116 = vmatprep.subr.mxu0 0.0
  %2117 = vmatpush1.msra.mxu0 %v1789
  %2118 = vmatprep.subr.mxu0 0.0
  %2119 = vmatpush1.msra.mxu0 %v1790
  %2120 = vmatprep.subr.mxu0 0.0
  %2121 = vmatpush1.msra.mxu0 %v1791
  %2122 = vmatprep.subr.mxu0 0.0
  %2123 = vmatpush1.msra.mxu0 %v1792
  %2124 = vmatprep.subr.mxu0 0.0
  %2125 = vmatpush1.msra.mxu0 %v1793
  %2126 = vmatprep.subr.mxu0 0.0
  %2127 = vmatpush1.msra.mxu0 %v1794
  %2128 = vmatprep.subr.mxu0 0.0
  %2129 = vmatpush1.msra.mxu0 %v1795
  %2130 = vmatprep.subr.mxu0 0.0
  %2131 = vmatpush1.msra.mxu0 %v1796
  %2132 = vmatprep.mubr.f32.mxu0 %v1640
  %2133 = vmatmul.mubr.f32.gmra.mrb[0].mxu0 %v1639
  %v2134 = vpop.f32.mrb[0].mxu0
  %v2135 = vadd.f32 %v2050, %v2134
  %v2136 = vpop.f32.mrb[0].mxu0
  %2137 = vmatprep.mubr.f32.mxu0 %v1649
  %2138 = vmatmul.mubr.f32.gmra.mrb[0].mxu0 %v1648
  %v2139 = vpop.f32.mrb[0].mxu0
  %v2140 = vadd.f32 %v2055, %v2139
  %v2141 = vpop.f32.mrb[0].mxu0
  %2142 = vmatprep.mubr.f32.mxu0 %v1658
  %2143 = vmatmul.mubr.f32.gmra.mrb[0].mxu0 %v1657
  %v2144 = vpop.f32.mrb[0].mxu0
  %v2145 = vadd.f32 %v2060, %v2144
  %v2146 = vpop.f32.mrb[0].mxu0
  %2147 = vmatprep.mubr.f32.mxu0 %v1667
  %2148 = vmatmul.mubr.f32.gmra.mrb[0].mxu0 %v1666
  %v2149 = vpop.f32.mrb[0].mxu0
  %v2150 = vadd.f32 %v2065, %v2149
  %v2151 = vpop.f32.mrb[0].mxu0
  %2152 = vdwg.mxu0
  %2153 = vmatprep.subr.mxu0 0.0
  %2154 = vmatpush1.msra.mxu0 %v1797
  %2155 = vmatprep.subr.mxu0 0.0
  %2156 = vmatpush1.msra.mxu0 %v1798
  %2157 = vmatprep.subr.mxu0 0.0
  %2158 = vmatpush1.msra.mxu0 %v1799
  %2159 = vmatprep.subr.mxu0 0.0
  %2160 = vmatpush1.msra.mxu0 %v1800
  %2161 = vmatprep.subr.mxu0 0.0
  %2162 = vmatpush1.msra.mxu0 %v1801
  %2163 = vmatprep.subr.mxu0 0.0
  %2164 = vmatpush1.msra.mxu0 %v1802
  %2165 = vmatprep.subr.mxu0 0.0
  %2166 = vmatpush1.msra.mxu0 %v1803
  %2167 = vmatprep.subr.mxu0 0.0
  %2168 = vmatpush1.msra.mxu0 %v1804
  %2169 = vmatprep.subr.mxu0 0.0
  %2170 = vmatpush1.msra.mxu0 %v1805
  %2171 = vmatprep.subr.mxu0 0.0
  %2172 = vmatpush1.msra.mxu0 %v1806
  %2173 = vmatprep.subr.mxu0 0.0
  %2174 = vmatpush1.msra.mxu0 %v1807
  %2175 = vmatprep.subr.mxu0 0.0
  %2176 = vmatpush1.msra.mxu0 %v1808
  %2177 = vmatprep.subr.mxu0 0.0
  %2178 = vmatpush1.msra.mxu0 %v1809
  %2179 = vmatprep.subr.mxu0 0.0
  %2180 = vmatpush1.msra.mxu0 %v1810
  %2181 = vmatprep.subr.mxu0 0.0
  %2182 = vmatpush1.msra.mxu0 %v1811
  %2183 = vmatprep.subr.mxu0 0.0
  %2184 = vmatpush1.msra.mxu0 %v1812
  %2185 = vmatprep.subr.mxu0 0.0
  %2186 = vmatpush1.msra.mxu0 0.0
  %2187 = vmatprep.subr.mxu0 0.0
  %2188 = vmatpush1.msra.mxu0 0.0
  %2189 = vmatprep.subr.mxu0 0.0
  %2190 = vmatpush1.msra.mxu0 0.0
  %2191 = vmatprep.subr.mxu0 0.0
  %2192 = vmatpush1.msra.mxu0 0.0
  %2193 = vmatprep.subr.mxu0 0.0
  %2194 = vmatpush1.msra.mxu0 0.0
  %2195 = vmatprep.subr.mxu0 0.0
  %2196 = vmatpush1.msra.mxu0 0.0
  %2197 = vmatprep.subr.mxu0 0.0
  %2198 = vmatpush1.msra.mxu0 0.0
  %2199 = vmatprep.subr.mxu0 0.0
  %2200 = vmatpush1.msra.mxu0 0.0
  %2201 = vmatprep.subr.mxu0 0.0
  %2202 = vmatpush1.msra.mxu0 0.0
  %2203 = vmatprep.subr.mxu0 0.0
  %2204 = vmatpush1.msra.mxu0 0.0
  %2205 = vmatprep.subr.mxu0 0.0
  %2206 = vmatpush1.msra.mxu0 0.0
  %2207 = vmatprep.subr.mxu0 0.0
  %2208 = vmatpush1.msra.mxu0 0.0
  %2209 = vmatprep.subr.mxu0 0.0
  %2210 = vmatpush1.msra.mxu0 0.0
  %2211 = vmatprep.subr.mxu0 0.0
  %2212 = vmatpush1.msra.mxu0 0.0
  %2213 = vmatprep.subr.mxu0 0.0
  %2214 = vmatpush1.msra.mxu0 0.0
  %2215 = vmatprep.subr.mxu0 0.0
  %2216 = vmatpush1.msra.mxu0 0.0
  %2217 = vmatprep.mubr.f32.mxu0 0.0
  %2218 = vmatmul.mubr.f32.gmra.mrb[0].mxu0 %v1641
  %v2219 = vpop.f32.mrb[0].mxu0
  %v2220 = vadd.f32 %v2135, %v2219
  %v2221 = vpop.f32.mrb[0].mxu0
  %2222 = vmatprep.mubr.f32.mxu0 0.0
  %2223 = vmatmul.mubr.f32.gmra.mrb[0].mxu0 %v1650
  %v2224 = vpop.f32.mrb[0].mxu0
  %v2225 = vadd.f32 %v2140, %v2224
  %v2226 = vpop.f32.mrb[0].mxu0
  %2227 = vmatprep.mubr.f32.mxu0 0.0
  %2228 = vmatmul.mubr.f32.gmra.mrb[0].mxu0 %v1659
  %v2229 = vpop.f32.mrb[0].mxu0
  %v2230 = vadd.f32 %v2145, %v2229
  %v2231 = vpop.f32.mrb[0].mxu0
  %2232 = vmatprep.mubr.f32.mxu0 0.0
  %2233 = vmatmul.mubr.f32.gmra.mrb[0].mxu0 %v1668
  %v2234 = vpop.f32.mrb[0].mxu0
  %v2235 = vadd.f32 %v2150, %v2234
  %v2236 = vpop.f32.mrb[0].mxu0
  %2237 = vdwg.mxu0
  %v2238 = vld [vmem:[%s3] sm:$0xff]
  %v2239 = vld [vmem:[%s3 + $0x8] sm:$0xff]
  %v2240 = vld [vmem:[%s3 + $0x10] sm:$0xff]
  %v2241 = vld [vmem:[%s3 + $0x18] sm:$0xff]
  %v2242 = vld [vmem:[%s3 + $0x20] sm:$0xff]
  %v2243 = vld [vmem:[%s3 + $0x28] sm:$0xff]
  %v2244 = vld [vmem:[%s3 + $0x30] sm:$0xff]
  %v2245 = vld [vmem:[%s3 + $0x38] sm:$0xff]
  %v2246 = vld [vmem:[%s3 + $0x40] sm:$0xff]
  %v2247 = vld [vmem:[%s3 + $0x48] sm:$0xff]
  %v2248 = vld [vmem:[%s3 + $0x50] sm:$0xff]
  %v2249 = vld [vmem:[%s3 + $0x58] sm:$0xff]
  %v2250 = vld [vmem:[%s3 + $0x60] sm:$0xff]
  %v2251 = vld [vmem:[%s3 + $0x68] sm:$0xff]
  %v2252 = vld [vmem:[%s3 + $0x70] sm:$0xff]
  %v2253 = vld [vmem:[%s3 + $0x78] sm:$0xff]
  %v2254 = vld [vmem:[%s3 + $0x80] sm:$0xff]
  %v2255 = vld [vmem:[%s3 + $0x88] sm:$0xff]
  %v2256 = vld [vmem:[%s3 + $0x90] sm:$0xff]
  %v2257 = vld [vmem:[%s3 + $0x98] sm:$0xff]
  %v2258 = vld [vmem:[%s3 + $0xa0] sm:$0xff]
  %v2259 = vld [vmem:[%s3 + $0xa8] sm:$0xff]
  %v2260 = vld [vmem:[%s3 + $0xb0] sm:$0xff]
  %v2261 = vld [vmem:[%s3 + $0xb8] sm:$0xff]
  %v2262 = vld [vmem:[%s3 + $0xc0] sm:$0xff]
  %v2263 = vld [vmem:[%s3 + $0xc8] sm:$0xff]
  %v2264 = vld [vmem:[%s3 + $0xd0] sm:$0xff]
  %v2265 = vld [vmem:[%s3 + $0xd8] sm:$0xff]
  %v2266 = vld [vmem:[%s3 + $0xe0] sm:$0xff]
  %v2267 = vld [vmem:[%s3 + $0xe8] sm:$0xff]
  %v2268 = vld [vmem:[%s3 + $0xf0] sm:$0xff]
  %v2269 = vld [vmem:[%s3 + $0xf8] sm:$0xff]
  %v2270 = vld [vmem:[%s3 + $0x100] sm:$0xff]
  %v2271 = vld [vmem:[%s3 + $0x108] sm:$0xff]
  %v2272 = vld [vmem:[%s3 + $0x110] sm:$0xff]
  %v2273 = vld [vmem:[%s3 + $0x118] sm:$0xff]
  %v2274 = vld [vmem:[%s3 + $0x120] sm:$0xff]
  %v2275 = vld [vmem:[%s3 + $0x128] sm:$0xff]
  %v2276 = vld [vmem:[%s3 + $0x130] sm:$0xff]
  %v2277 = vld [vmem:[%s3 + $0x138] sm:$0xff]
  %v2278 = vld [vmem:[%s3 + $0x140] sm:$0xff]
  %v2279 = vld [vmem:[%s3 + $0x148] sm:$0xff]
  %v2280 = vld [vmem:[%s3 + $0x150] sm:$0xff]
  %v2281 = vld [vmem:[%s3 + $0x158] sm:$0xff]
  %v2282 = vld [vmem:[%s3 + $0x160] sm:$0xff]
  %v2283 = vld [vmem:[%s3 + $0x168] sm:$0xff]
  %v2284 = vld [vmem:[%s3 + $0x170] sm:$0xff]
  %v2285 = vld [vmem:[%s3 + $0x178] sm:$0xff]
  %v2286 = vld [vmem:[%s3 + $0x180] sm:$0xff]
  %v2287 = vld [vmem:[%s3 + $0x188] sm:$0xff]
  %v2288 = vld [vmem:[%s3 + $0x190] sm:$0xff]
  %v2289 = vld [vmem:[%s3 + $0x198] sm:$0xff]
  %v2290 = vld [vmem:[%s3 + $0x1a0] sm:$0xff]
  %v2291 = vld [vmem:[%s3 + $0x1a8] sm:$0xff]
  %v2292 = vld [vmem:[%s3 + $0x1b0] sm:$0xff]
  %v2293 = vld [vmem:[%s3 + $0x1b8] sm:$0xff]
  %v2294 = vld [vmem:[%s3 + $0x1c0] sm:$0xff]
  %v2295 = vld [vmem:[%s3 + $0x1c8] sm:$0xff]
  %v2296 = vld [vmem:[%s3 + $0x1d0] sm:$0xff]
  %v2297 = vld [vmem:[%s3 + $0x1d8] sm:$0xff]
  %v2298 = vld [vmem:[%s3 + $0x1e0] sm:$0xff]
  %v2299 = vld [vmem:[%s3 + $0x1e8] sm:$0xff]
  %v2300 = vld [vmem:[%s3 + $0x1f0] sm:$0xff]
  %v2301 = vld [vmem:[%s3 + $0x1f8] sm:$0xff]
  %v2302 = vld [vmem:[%s3 + $0x200] sm:$0xff]
  %v2303 = vld [vmem:[%s3 + $0x208] sm:$0xff]
  %v2304 = vld [vmem:[%s3 + $0x210] sm:$0xff]
  %v2305 = vld [vmem:[%s3 + $0x218] sm:$0xff]
  %v2306 = vld [vmem:[%s3 + $0x220] sm:$0xff]
  %v2307 = vld [vmem:[%s3 + $0x228] sm:$0xff]
  %v2308 = vld [vmem:[%s3 + $0x230] sm:$0xff]
  %v2309 = vld [vmem:[%s3 + $0x238] sm:$0xff]
  %v2310 = vld [vmem:[%s3 + $0x240] sm:$0xff]
  %v2311 = vld [vmem:[%s3 + $0x248] sm:$0xff]
  %v2312 = vld [vmem:[%s3 + $0x250] sm:$0xff]
  %v2313 = vld [vmem:[%s3 + $0x258] sm:$0xff]
  %v2314 = vld [vmem:[%s3 + $0x260] sm:$0xff]
  %v2315 = vld [vmem:[%s3 + $0x268] sm:$0xff]
  %v2316 = vld [vmem:[%s3 + $0x270] sm:$0xff]
  %v2317 = vld [vmem:[%s3 + $0x278] sm:$0xff]
  %v2318 = vld [vmem:[%s3 + $0x280] sm:$0xff]
  %v2319 = vld [vmem:[%s3 + $0x288] sm:$0xff]
  %v2320 = vld [vmem:[%s3 + $0x290] sm:$0xff]
  %v2321 = vld [vmem:[%s3 + $0x298] sm:$0xff]
  %v2322 = vld [vmem:[%s3 + $0x2a0] sm:$0xff]
  %v2323 = vld [vmem:[%s3 + $0x2a8] sm:$0xff]
  %v2324 = vld [vmem:[%s3 + $0x2b0] sm:$0xff]
  %v2325 = vld [vmem:[%s3 + $0x2b8] sm:$0xff]
  %v2326 = vld [vmem:[%s3 + $0x2c0] sm:$0xff]
  %v2327 = vld [vmem:[%s3 + $0x2c8] sm:$0xff]
  %v2328 = vld [vmem:[%s3 + $0x2d0] sm:$0xff]
  %v2329 = vld [vmem:[%s3 + $0x2d8] sm:$0xff]
  %v2330 = vld [vmem:[%s3 + $0x2e0] sm:$0xff]
  %v2331 = vld [vmem:[%s3 + $0x2e8] sm:$0xff]
  %v2332 = vld [vmem:[%s3 + $0x2f0] sm:$0xff]
  %v2333 = vld [vmem:[%s3 + $0x2f8] sm:$0xff]
  %v2334 = vld [vmem:[%s3 + $0x300] sm:$0xff]
  %v2335 = vld [vmem:[%s3 + $0x308] sm:$0xff]
  %v2336 = vld [vmem:[%s3 + $0x310] sm:$0xff]
  %v2337 = vld [vmem:[%s3 + $0x318] sm:$0xff]
  %v2338 = vld [vmem:[%s3 + $0x320] sm:$0xff]
  %v2339 = vld [vmem:[%s3 + $0x328] sm:$0xff]
  %v2340 = vld [vmem:[%s3 + $0x330] sm:$0xff]
  %v2341 = vld [vmem:[%s3 + $0x338] sm:$0xff]
  %v2342 = vld [vmem:[%s3 + $0x340] sm:$0xff]
  %v2343 = vld [vmem:[%s3 + $0x348] sm:$0xff]
  %v2344 = vld [vmem:[%s3 + $0x350] sm:$0xff]
  %v2345 = vld [vmem:[%s3 + $0x358] sm:$0xff]
  %v2346 = vld [vmem:[%s3 + $0x360] sm:$0xff]
  %v2347 = vld [vmem:[%s3 + $0x368] sm:$0xff]
  %v2348 = vld [vmem:[%s3 + $0x370] sm:$0xff]
  %v2349 = vld [vmem:[%s3 + $0x378] sm:$0xff]
  %2350 = vst.msk [vmem:[%s5] sm:$0xff] %vm43, %v2238
  %2351 = vst.msk [vmem:[%s5 + $0x8] sm:$0xff] %vm43, %v2239
  %2352 = vst.msk [vmem:[%s5 + $0x10] sm:$0xff] %vm43, %v2240
  %2353 = vst.msk [vmem:[%s5 + $0x18] sm:$0xff] %vm43, %v2241
  %2354 = vst.msk [vmem:[%s5 + $0x20] sm:$0xff] %vm43, %v2242
  %2355 = vst.msk [vmem:[%s5 + $0x28] sm:$0xff] %vm43, %v2243
  %2356 = vst.msk [vmem:[%s5 + $0x30] sm:$0xff] %vm43, %v2244
  %2357 = vst.msk [vmem:[%s5 + $0x38] sm:$0xff] %vm43, %v2245
  %2358 = vst.msk [vmem:[%s5 + $0x40] sm:$0xff] %vm43, %v2246
  %2359 = vst.msk [vmem:[%s5 + $0x48] sm:$0xff] %vm43, %v2247
  %2360 = vst.msk [vmem:[%s5 + $0x50] sm:$0xff] %vm43, %v2248
  %2361 = vst.msk [vmem:[%s5 + $0x58] sm:$0xff] %vm43, %v2249
  %2362 = vst.msk [vmem:[%s5 + $0x60] sm:$0xff] %vm43, %v2250
  %2363 = vst.msk [vmem:[%s5 + $0x68] sm:$0xff] %vm43, %v2251
  %2364 = vst.msk [vmem:[%s5 + $0x70] sm:$0xff] %vm43, %v2252
  %2365 = vst.msk [vmem:[%s5 + $0x78] sm:$0xff] %vm43, %v2253
  %2366 = vst.msk [vmem:[%s5 + $0x80] sm:$0xff] %vm43, %v2254
  %2367 = vst.msk [vmem:[%s5 + $0x88] sm:$0xff] %vm43, %v2255
  %2368 = vst.msk [vmem:[%s5 + $0x90] sm:$0xff] %vm43, %v2256
  %2369 = vst.msk [vmem:[%s5 + $0x98] sm:$0xff] %vm43, %v2257
  %2370 = vst.msk [vmem:[%s5 + $0xa0] sm:$0xff] %vm43, %v2258
  %2371 = vst.msk [vmem:[%s5 + $0xa8] sm:$0xff] %vm43, %v2259
  %2372 = vst.msk [vmem:[%s5 + $0xb0] sm:$0xff] %vm43, %v2260
  %2373 = vst.msk [vmem:[%s5 + $0xb8] sm:$0xff] %vm43, %v2261
  %2374 = vst.msk [vmem:[%s5 + $0xc0] sm:$0xff] %vm43, %v2262
  %2375 = vst.msk [vmem:[%s5 + $0xc8] sm:$0xff] %vm43, %v2263
  %2376 = vst.msk [vmem:[%s5 + $0xd0] sm:$0xff] %vm43, %v2264
  %2377 = vst.msk [vmem:[%s5 + $0xd8] sm:$0xff] %vm43, %v2265
  %2378 = vst.msk [vmem:[%s5 + $0xe0] sm:$0xff] %vm43, %v2266
  %2379 = vst.msk [vmem:[%s5 + $0xe8] sm:$0xff] %vm43, %v2267
  %2380 = vst.msk [vmem:[%s5 + $0xf0] sm:$0xff] %vm43, %v2268
  %2381 = vst.msk [vmem:[%s5 + $0xf8] sm:$0xff] %vm43, %v2269
  %2382 = vst.msk [vmem:[%s5 + $0x100] sm:$0xff] %vm43, %v2270
  %2383 = vst.msk [vmem:[%s5 + $0x108] sm:$0xff] %vm43, %v2271
  %2384 = vst.msk [vmem:[%s5 + $0x110] sm:$0xff] %vm43, %v2272
  %2385 = vst.msk [vmem:[%s5 + $0x118] sm:$0xff] %vm43, %v2273
  %2386 = vst.msk [vmem:[%s5 + $0x120] sm:$0xff] %vm43, %v2274
  %2387 = vst.msk [vmem:[%s5 + $0x128] sm:$0xff] %vm43, %v2275
  %2388 = vst.msk [vmem:[%s5 + $0x130] sm:$0xff] %vm43, %v2276
  %2389 = vst.msk [vmem:[%s5 + $0x138] sm:$0xff] %vm43, %v2277
  %2390 = vst.msk [vmem:[%s5 + $0x140] sm:$0xff] %vm43, %v2278
  %2391 = vst.msk [vmem:[%s5 + $0x148] sm:$0xff] %vm43, %v2279
  %2392 = vst.msk [vmem:[%s5 + $0x150] sm:$0xff] %vm43, %v2280
  %2393 = vst.msk [vmem:[%s5 + $0x158] sm:$0xff] %vm43, %v2281
  %2394 = vst.msk [vmem:[%s5 + $0x160] sm:$0xff] %vm43, %v2282
  %2395 = vst.msk [vmem:[%s5 + $0x168] sm:$0xff] %vm43, %v2283
  %2396 = vst.msk [vmem:[%s5 + $0x170] sm:$0xff] %vm43, %v2284
  %2397 = vst.msk [vmem:[%s5 + $0x178] sm:$0xff] %vm43, %v2285
  %2398 = vst.msk [vmem:[%s5 + $0x180] sm:$0xff] %vm43, %v2286
  %2399 = vst.msk [vmem:[%s5 + $0x188] sm:$0xff] %vm43, %v2287
  %2400 = vst.msk [vmem:[%s5 + $0x190] sm:$0xff] %vm43, %v2288
  %2401 = vst.msk [vmem:[%s5 + $0x198] sm:$0xff] %vm43, %v2289
  %2402 = vst.msk [vmem:[%s5 + $0x1a0] sm:$0xff] %vm43, %v2290
  %2403 = vst.msk [vmem:[%s5 + $0x1a8] sm:$0xff] %vm43, %v2291
  %2404 = vst.msk [vmem:[%s5 + $0x1b0] sm:$0xff] %vm43, %v2292
  %2405 = vst.msk [vmem:[%s5 + $0x1b8] sm:$0xff] %vm43, %v2293
  %2406 = vst.msk [vmem:[%s5 + $0x1c0] sm:$0xff] %vm43, %v2294
  %2407 = vst.msk [vmem:[%s5 + $0x1c8] sm:$0xff] %vm43, %v2295
  %2408 = vst.msk [vmem:[%s5 + $0x1d0] sm:$0xff] %vm43, %v2296
  %2409 = vst.msk [vmem:[%s5 + $0x1d8] sm:$0xff] %vm43, %v2297
  %2410 = vst.msk [vmem:[%s5 + $0x1e0] sm:$0xff] %vm43, %v2298
  %2411 = vst.msk [vmem:[%s5 + $0x1e8] sm:$0xff] %vm43, %v2299
  %2412 = vst.msk [vmem:[%s5 + $0x1f0] sm:$0xff] %vm43, %v2300
  %2413 = vst.msk [vmem:[%s5 + $0x1f8] sm:$0xff] %vm43, %v2301
  %2414 = vst.msk [vmem:[%s5 + $0x200] sm:$0xff] %vm43, %v2302
  %2415 = vst.msk [vmem:[%s5 + $0x208] sm:$0xff] %vm43, %v2303
  %2416 = vst.msk [vmem:[%s5 + $0x210] sm:$0xff] %vm43, %v2304
  %2417 = vst.msk [vmem:[%s5 + $0x218] sm:$0xff] %vm43, %v2305
  %2418 = vst.msk [vmem:[%s5 + $0x220] sm:$0xff] %vm43, %v2306
  %2419 = vst.msk [vmem:[%s5 + $0x228] sm:$0xff] %vm43, %v2307
  %2420 = vst.msk [vmem:[%s5 + $0x230] sm:$0xff] %vm43, %v2308
  %2421 = vst.msk [vmem:[%s5 + $0x238] sm:$0xff] %vm43, %v2309
  %2422 = vst.msk [vmem:[%s5 + $0x240] sm:$0xff] %vm43, %v2310
  %2423 = vst.msk [vmem:[%s5 + $0x248] sm:$0xff] %vm43, %v2311
  %2424 = vst.msk [vmem:[%s5 + $0x250] sm:$0xff] %vm43, %v2312
  %2425 = vst.msk [vmem:[%s5 + $0x258] sm:$0xff] %vm43, %v2313
  %2426 = vst.msk [vmem:[%s5 + $0x260] sm:$0xff] %vm43, %v2314
  %2427 = vst.msk [vmem:[%s5 + $0x268] sm:$0xff] %vm43, %v2315
  %2428 = vst.msk [vmem:[%s5 + $0x270] sm:$0xff] %vm43, %v2316
  %2429 = vst.msk [vmem:[%s5 + $0x278] sm:$0xff] %vm43, %v2317
  %2430 = vst.msk [vmem:[%s5 + $0x280] sm:$0xff] %vm43, %v2318
  %2431 = vst.msk [vmem:[%s5 + $0x288] sm:$0xff] %vm43, %v2319
  %2432 = vst.msk [vmem:[%s5 + $0x290] sm:$0xff] %vm43, %v2320
  %2433 = vst.msk [vmem:[%s5 + $0x298] sm:$0xff] %vm43, %v2321
  %2434 = vst.msk [vmem:[%s5 + $0x2a0] sm:$0xff] %vm43, %v2322
  %2435 = vst.msk [vmem:[%s5 + $0x2a8] sm:$0xff] %vm43, %v2323
  %2436 = vst.msk [vmem:[%s5 + $0x2b0] sm:$0xff] %vm43, %v2324
  %2437 = vst.msk [vmem:[%s5 + $0x2b8] sm:$0xff] %vm43, %v2325
  %2438 = vst.msk [vmem:[%s5 + $0x2c0] sm:$0xff] %vm43, %v2326
  %2439 = vst.msk [vmem:[%s5 + $0x2c8] sm:$0xff] %vm43, %v2327
  %2440 = vst.msk [vmem:[%s5 + $0x2d0] sm:$0xff] %vm43, %v2328
  %2441 = vst.msk [vmem:[%s5 + $0x2d8] sm:$0xff] %vm43, %v2329
  %2442 = vst.msk [vmem:[%s5 + $0x2e0] sm:$0xff] %vm43, %v2330
  %2443 = vst.msk [vmem:[%s5 + $0x2e8] sm:$0xff] %vm43, %v2331
  %2444 = vst.msk [vmem:[%s5 + $0x2f0] sm:$0xff] %vm43, %v2332
  %2445 = vst.msk [vmem:[%s5 + $0x2f8] sm:$0xff] %vm43, %v2333
  %2446 = vst.msk [vmem:[%s5 + $0x300] sm:$0xff] %vm43, %v2334
  %2447 = vst.msk [vmem:[%s5 + $0x308] sm:$0xff] %vm43, %v2335
  %2448 = vst.msk [vmem:[%s5 + $0x310] sm:$0xff] %vm43, %v2336
  %2449 = vst.msk [vmem:[%s5 + $0x318] sm:$0xff] %vm43, %v2337
  %2450 = vst.msk [vmem:[%s5 + $0x320] sm:$0xff] %vm43, %v2338
  %2451 = vst.msk [vmem:[%s5 + $0x328] sm:$0xff] %vm43, %v2339
  %2452 = vst.msk [vmem:[%s5 + $0x330] sm:$0xff] %vm43, %v2340
  %2453 = vst.msk [vmem:[%s5 + $0x338] sm:$0xff] %vm43, %v2341
  %2454 = vst.msk [vmem:[%s5 + $0x340] sm:$0xff] %vm43, %v2342
  %2455 = vst.msk [vmem:[%s5 + $0x348] sm:$0xff] %vm43, %v2343
  %2456 = vst.msk [vmem:[%s5 + $0x350] sm:$0xff] %vm43, %v2344
  %2457 = vst.msk [vmem:[%s5 + $0x358] sm:$0xff] %vm43, %v2345
  %2458 = vst.msk [vmem:[%s5 + $0x360] sm:$0xff] %vm43, %v2346
  %2459 = vst.msk [vmem:[%s5 + $0x368] sm:$0xff] %vm43, %v2347
  %2460 = vst.msk [vmem:[%s5 + $0x370] sm:$0xff] %vm43, %v2348
  %2461 = vst.msk [vmem:[%s5 + $0x378] sm:$0xff] %vm43, %v2349
  %2462 = vst.msk [vmem:[%s5 + $0x380] sm:$0xff] %vm43, %v2220
  %2463 = vst.msk [vmem:[%s5 + $0x388] sm:$0xff] %vm43, %v2225
  %2464 = vst.msk [vmem:[%s5 + $0x390] sm:$0xff] %vm43, %v2230
  %2465 = vst.msk [vmem:[%s5 + $0x398] sm:$0xff] %vm43, %v2235
  %v2466 = vld [vmem:[%s4] sm:$0xff]
  %v2467 = vld [vmem:[%s4 + $0x8] sm:$0xff]
  %v2468 = vld [vmem:[%s4 + $0x10] sm:$0xff]
  %v2469 = vld [vmem:[%s4 + $0x18] sm:$0xff]
  %2470 = vst.msk [vmem:[%s5 + $0x3a0] sm:$0xff] %vm43, %v2466
  %2471 = vst.msk [vmem:[%s5 + $0x3a8] sm:$0xff] %vm43, %v2467
  %2472 = vst.msk [vmem:[%s5 + $0x3b0] sm:$0xff] %vm43, %v2468
  %2473 = vst.msk [vmem:[%s5 + $0x3b8] sm:$0xff] %vm43, %v2469
  // Predicated region
  $region22: #{tpu_custom_call.1} parent=0 // pred_check
    _
  $region23: #{tpu_custom_call.1} parent=0 // pred_check_branch
    %2475 = sbr.rel (0) target = $region25
  $region24: #{tpu_custom_call.1} parent=0 // pred_region
    _
  $region25: #{tpu_custom_call.1} parent=0 // pred_fallthru
    _
  // Predicated region
  $region26: #{tpu_custom_call.1} parent=0 // pred_check
    _
  $region27: #{tpu_custom_call.1} parent=0 // pred_check_branch
    %2477 = sbr.rel (0) target = $region29
  $region28: #{tpu_custom_call.1} parent=0 // pred_region
    _
  $region29: #{tpu_custom_call.1} parent=0 // pred_fallthru
    _

</llo_original>
